<compile_context>
chip_gen: v5e
topology: v5e:2x2
jax: 0.10.0
libtpu: 0.0.40
codegen_flags: <defaults>
</compile_context>

<pallas_src>
import functools

import jax
import jax.numpy as jnp
from jax.experimental import pallas as pl
from jax.experimental.pallas import tpu as pltpu


CFG = dict(vocab=100, max_pos=16, type_vocab=2, hidden=32, n_heads=2,
           intermediate=64, n_layers=2)


# ------------------------------ fused kernel --------------------------------


def _fused_bert_kernel(emb_ref, mask_ref, eln_g_ref, eln_b_ref,
                       w_qkv_ref, b_qkv_ref, w_o_ref, b_o_ref,
                       ln1_g_ref, ln1_b_ref, w_i_ref, b_i_ref,
                       w_o2_ref, b_o2_ref, ln2_g_ref, ln2_b_ref,
                       fc_w_ref, fc_b_ref, o_ref, *, n_layers, n_heads, eps):
    """One grid step = one batch element: full encoder + CLS head in VMEM."""
    S, H = emb_ref.shape[1], emb_ref.shape[2]
    dH = H // n_heads
    scale = 1.0 / float(dH) ** 0.5

    def layernorm(x, g, b):
        mean = jnp.mean(x, axis=-1, keepdims=True)
        c = x - mean
        var = jnp.mean(c * c, axis=-1, keepdims=True)
        return (c * jax.lax.rsqrt(var + eps)) * g + b

    # embedding LayerNorm (embedding sum computed in the JAX wrapper)
    h = layernorm(emb_ref[0], eln_g_ref[...], eln_b_ref[...])        # (S, H) f32

    # additive attention mask, shared by all heads and layers: (1, S)
    # NOTE: a fully-masked row would softmax to uniform weights over padded
    # keys (acceptable for [CLS] classification).
    neg = (mask_ref[0] - 1.0) * 1e9

    for l in range(n_layers):            # static, tiny -> fully unrolled
        # ---- fused QKV projection: (S, H) @ (H, 3H) ----
        qkv = (jnp.dot(h, w_qkv_ref[l], preferred_element_type=jnp.float32)
               + b_qkv_ref[l])                                       # (S, 3H)

        # ---- per-head attention; heads sliced on the lane axis, all in VMEM ----
        ctx_heads = []
        for hd in range(n_heads):
            lo = hd * dH
            qh = qkv[:, lo:lo + dH]                                  # (S, dH)
            kh = qkv[:, H + lo:H + lo + dH]                          # (S, dH)
            vh = qkv[:, 2 * H + lo:2 * H + lo + dH]                  # (S, dH)
            s = jnp.dot(qh, kh.T, preferred_element_type=jnp.float32) * scale
            s = s + neg
            s = s - jnp.max(s, axis=-1, keepdims=True)
            p = jnp.exp(s)
            p = p * pl.reciprocal(jnp.sum(p, axis=-1, keepdims=True), approx=True)
            ctx_heads.append(jnp.dot(p, vh, preferred_element_type=jnp.float32))
        ctx = jnp.concatenate(ctx_heads, axis=-1)                    # (S, H)

        # ---- attention output projection + residual + LN1 ----
        attn = (jnp.dot(ctx, w_o_ref[l], preferred_element_type=jnp.float32)
                + b_o_ref[l])
        h = layernorm(attn + h, ln1_g_ref[l], ln1_b_ref[l])

        # ---- FFN (tanh-approx GELU) + residual + LN2 ----
        x = (jnp.dot(h, w_i_ref[l], preferred_element_type=jnp.float32)
             + b_i_ref[l])
        x = 0.5 * x * (1.0 + jnp.tanh(0.7978845608028654 *
                                      (x + 0.044715 * x * x * x)))
        ffn = (jnp.dot(x, w_o2_ref[l], preferred_element_type=jnp.float32)
               + b_o2_ref[l])
        h = layernorm(ffn + h, ln2_g_ref[l], ln2_b_ref[l])

    # ---- CLS head: bert_out[:, 0, :] -> fc(H -> 1) as VPU reduction -> sigmoid
    cls = h[0:1, :]                                                  # (1, H)
    logit = jnp.sum(cls * fc_w_ref[...], axis=-1, keepdims=True) + fc_b_ref[...]
    o_ref[0] = 1.0 / (1.0 + jnp.exp(-logit))                         # (1, 1)


# --------------------------- parameter creation ------------------------------


def init_params(key, cfg=CFG):
    H, I, L = cfg["hidden"], cfg["intermediate"], cfg["n_layers"]
    keys = iter(jax.random.split(key, 64))

    def nrm(shape):
        return 0.02 * jax.random.normal(next(keys), shape, jnp.float32)

    return {
        # embeddings
        "word_emb": nrm((cfg["vocab"], H)),
        "pos_emb": nrm((cfg["max_pos"], H)),
        "type_emb": nrm((cfg["type_vocab"], H)),
        "emb_ln_g": jnp.ones((1, H), jnp.float32),
        "emb_ln_b": jnp.zeros((1, H), jnp.float32),
        # per-layer encoder weights stacked on a leading layer axis; QKV fused
        "w_qkv": nrm((L, H, 3 * H)),
        "b_qkv": jnp.zeros((L, 1, 3 * H), jnp.float32),
        "w_o": nrm((L, H, H)),
        "b_o": jnp.zeros((L, 1, H), jnp.float32),
        "ln1_g": jnp.ones((L, 1, H), jnp.float32),
        "ln1_b": jnp.zeros((L, 1, H), jnp.float32),
        "w_i": nrm((L, H, I)),
        "b_i": jnp.zeros((L, 1, I), jnp.float32),
        "w_o2": nrm((L, I, H)),
        "b_o2": jnp.zeros((L, 1, H), jnp.float32),
        "ln2_g": jnp.ones((L, 1, H), jnp.float32),
        "ln2_b": jnp.zeros((L, 1, H), jnp.float32),
        # classification head nn.Linear(hidden, 1); weight stored as [1, H]
        "fc_w": nrm((1, H)),
        "fc_b": jnp.zeros((1, 1), jnp.float32),
    }


# ------------------------------- forward pass --------------------------------


def classify_berturk_forward(params, input_ids, token_type_ids, attention_mask,
                             cfg=CFG):
    B, S = input_ids.shape
    H, nH = cfg["hidden"], cfg["n_heads"]
    I, L = cfg["intermediate"], cfg["n_layers"]

    # --- embedding gathers: plain-JAX glue (no clean Pallas gather here) ---
    emb = (params["word_emb"][input_ids]
           + params["pos_emb"][jnp.arange(S)][None, :, :]
           + params["type_emb"][token_type_ids]).astype(jnp.float32)   # [B,S,H]

    # single [B,1,S] mask, broadcast over heads inside the kernel
    mask = attention_mask.astype(jnp.float32).reshape(B, 1, S)

    out = pl.pallas_call(
        functools.partial(_fused_bert_kernel,
                          n_layers=L, n_heads=nH, eps=1e-12),
        out_shape=jax.ShapeDtypeStruct((B, 1, 1), jnp.float32),
        grid=(B,),
        in_specs=[
            pl.BlockSpec((1, S, H), lambda b: (b, 0, 0)),       # emb
            pl.BlockSpec((1, 1, S), lambda b: (b, 0, 0)),       # mask
            pl.BlockSpec((1, H), lambda b: (0, 0)),             # emb_ln_g
            pl.BlockSpec((1, H), lambda b: (0, 0)),             # emb_ln_b
            pl.BlockSpec((L, H, 3 * H), lambda b: (0, 0, 0)),   # w_qkv
            pl.BlockSpec((L, 1, 3 * H), lambda b: (0, 0, 0)),   # b_qkv
            pl.BlockSpec((L, H, H), lambda b: (0, 0, 0)),       # w_o
            pl.BlockSpec((L, 1, H), lambda b: (0, 0, 0)),       # b_o
            pl.BlockSpec((L, 1, H), lambda b: (0, 0, 0)),       # ln1_g
            pl.BlockSpec((L, 1, H), lambda b: (0, 0, 0)),       # ln1_b
            pl.BlockSpec((L, H, I), lambda b: (0, 0, 0)),       # w_i
            pl.BlockSpec((L, 1, I), lambda b: (0, 0, 0)),       # b_i
            pl.BlockSpec((L, I, H), lambda b: (0, 0, 0)),       # w_o2
            pl.BlockSpec((L, 1, H), lambda b: (0, 0, 0)),       # b_o2
            pl.BlockSpec((L, 1, H), lambda b: (0, 0, 0)),       # ln2_g
            pl.BlockSpec((L, 1, H), lambda b: (0, 0, 0)),       # ln2_b
            pl.BlockSpec((1, H), lambda b: (0, 0)),             # fc_w
            pl.BlockSpec((1, 1), lambda b: (0, 0)),             # fc_b
        ],
        out_specs=pl.BlockSpec((1, 1, 1), lambda b: (b, 0, 0)),
        compiler_params=pltpu.CompilerParams(
            dimension_semantics=("parallel",)),                 # v7x megacore
    )(emb, mask, params["emb_ln_g"], params["emb_ln_b"],
      params["w_qkv"], params["b_qkv"], params["w_o"], params["b_o"],
      params["ln1_g"], params["ln1_b"], params["w_i"], params["b_i"],
      params["w_o2"], params["b_o2"], params["ln2_g"], params["ln2_b"],
      params["fc_w"], params["fc_b"])

    return out.reshape(B, 1)                                          # [B, 1]


# ---------------------------------- main --------------------------------------


if __name__ == "__main__":
    key = jax.random.PRNGKey(0)
    k_param, k_ids = jax.random.split(key)

    B, S = 2, 8
    params = init_params(k_param)
    input_ids = jax.random.randint(k_ids, (B, S), 0, CFG["vocab"], dtype=jnp.int32)
    token_type_ids = jnp.zeros((B, S), jnp.int32)
    attention_mask = jnp.ones((B, S), jnp.int32).at[1, S - 1].set(0)  # 1 pad token

    # TODO(synk): AutoModel.from_pretrained checkpoint loading has no in-script
    # equivalent; encoder weights are random-initialized with the same shapes.
    out = classify_berturk_forward(params, input_ids, token_type_ids,
                                   attention_mask)
    out = jax.block_until_ready(out)

    assert out.shape == (B, 1) and out.dtype == jnp.float32
    assert bool(jnp.all((out > 0.0) & (out < 1.0)))
    print("KERNEL_OK")
</pallas_src>

<mosaic_0001>
module attributes {stable_mosaic.version = 11 : i64} {
  func.func @_fused_bert_kernel(%arg0: i32, %arg1: memref<1x8x32xf32, #tpu.memory_space<vmem>>, %arg2: memref<1x1x8xf32, #tpu.memory_space<vmem>>, %arg3: memref<1x32xf32, #tpu.memory_space<vmem>>, %arg4: memref<1x32xf32, #tpu.memory_space<vmem>>, %arg5: memref<2x32x96xf32, #tpu.memory_space<vmem>>, %arg6: memref<2x1x96xf32, #tpu.memory_space<vmem>>, %arg7: memref<2x32x32xf32, #tpu.memory_space<vmem>>, %arg8: memref<2x1x32xf32, #tpu.memory_space<vmem>>, %arg9: memref<2x1x32xf32, #tpu.memory_space<vmem>>, %arg10: memref<2x1x32xf32, #tpu.memory_space<vmem>>, %arg11: memref<2x32x64xf32, #tpu.memory_space<vmem>>, %arg12: memref<2x1x64xf32, #tpu.memory_space<vmem>>, %arg13: memref<2x64x32xf32, #tpu.memory_space<vmem>>, %arg14: memref<2x1x32xf32, #tpu.memory_space<vmem>>, %arg15: memref<2x1x32xf32, #tpu.memory_space<vmem>>, %arg16: memref<2x1x32xf32, #tpu.memory_space<vmem>>, %arg17: memref<1x32xf32, #tpu.memory_space<vmem>>, %arg18: memref<1x1xf32, #tpu.memory_space<vmem>>, %arg19: memref<1x1x1xf32, #tpu.memory_space<vmem>>) attributes {dimension_semantics = [#tpu.dimension_semantics<parallel>], iteration_bounds = array<i64: 2>, scalar_prefetch = 0 : i64, scratch_operands = 0 : i64, tpu.core_type = #tpu.core_type<tc>, window_params = [{transform_indices = @transform_0, window_bounds = array<i64: 1, 8, 32>}, {transform_indices = @transform_1, window_bounds = array<i64: 1, 1, 8>}, {pipeline_mode = #tpu.pipeline_mode<synchronous>, transform_indices = @transform_2, window_bounds = array<i64: 1, 32>}, {pipeline_mode = #tpu.pipeline_mode<synchronous>, transform_indices = @transform_3, window_bounds = array<i64: 1, 32>}, {pipeline_mode = #tpu.pipeline_mode<synchronous>, transform_indices = @transform_4, window_bounds = array<i64: 2, 32, 96>}, {pipeline_mode = #tpu.pipeline_mode<synchronous>, transform_indices = @transform_5, window_bounds = array<i64: 2, 1, 96>}, {pipeline_mode = #tpu.pipeline_mode<synchronous>, transform_indices = @transform_6, window_bounds = array<i64: 2, 32, 32>}, {pipeline_mode = #tpu.pipeline_mode<synchronous>, transform_indices = @transform_7, window_bounds = array<i64: 2, 1, 32>}, {pipeline_mode = #tpu.pipeline_mode<synchronous>, transform_indices = @transform_8, window_bounds = array<i64: 2, 1, 32>}, {pipeline_mode = #tpu.pipeline_mode<synchronous>, transform_indices = @transform_9, window_bounds = array<i64: 2, 1, 32>}, {pipeline_mode = #tpu.pipeline_mode<synchronous>, transform_indices = @transform_10, window_bounds = array<i64: 2, 32, 64>}, {pipeline_mode = #tpu.pipeline_mode<synchronous>, transform_indices = @transform_11, window_bounds = array<i64: 2, 1, 64>}, {pipeline_mode = #tpu.pipeline_mode<synchronous>, transform_indices = @transform_12, window_bounds = array<i64: 2, 64, 32>}, {pipeline_mode = #tpu.pipeline_mode<synchronous>, transform_indices = @transform_13, window_bounds = array<i64: 2, 1, 32>}, {pipeline_mode = #tpu.pipeline_mode<synchronous>, transform_indices = @transform_14, window_bounds = array<i64: 2, 1, 32>}, {pipeline_mode = #tpu.pipeline_mode<synchronous>, transform_indices = @transform_15, window_bounds = array<i64: 2, 1, 32>}, {pipeline_mode = #tpu.pipeline_mode<synchronous>, transform_indices = @transform_16, window_bounds = array<i64: 1, 32>}, {pipeline_mode = #tpu.pipeline_mode<synchronous>, transform_indices = @transform_17, window_bounds = array<i64: 1, 1>}, {transform_indices = @transform_18, window_bounds = array<i64: 1, 1, 1>}]} {
    %c0 = arith.constant 0 : index
    %c0_0 = arith.constant 0 : index
    %c0_1 = arith.constant 0 : index
    %0 = vector.load %arg1[%c0, %c0_0, %c0_1] : memref<1x8x32xf32, #tpu.memory_space<vmem>>, vector<1x8x32xf32>
    %1 = vector.shape_cast %0 : vector<1x8x32xf32> to vector<8x32xf32>
    %c0_2 = arith.constant 0 : index
    %c0_3 = arith.constant 0 : index
    %2 = vector.load %arg3[%c0_2, %c0_3] : memref<1x32xf32, #tpu.memory_space<vmem>>, vector<1x32xf32>
    %c0_4 = arith.constant 0 : index
    %c0_5 = arith.constant 0 : index
    %3 = vector.load %arg4[%c0_4, %c0_5] : memref<1x32xf32, #tpu.memory_space<vmem>>, vector<1x32xf32>
    %cst = arith.constant dense<0.000000e+00> : vector<8xf32>
    %4 = vector.multi_reduction <add>, %1, %cst [1] : vector<8x32xf32> to vector<8xf32>
    %5 = vector.shape_cast %4 : vector<8xf32> to vector<8x1xf32>
    %cst_6 = arith.constant 3.200000e+01 : f32
    %6 = vector.broadcast %cst_6 : f32 to vector<8x1xf32>
    %7 = arith.divf %5, %6 : vector<8x1xf32>
    %8 = vector.broadcast %7 : vector<8x1xf32> to vector<8x32xf32>
    %9 = arith.subf %1, %8 : vector<8x32xf32>
    %10 = arith.mulf %9, %9 : vector<8x32xf32>
    %cst_7 = arith.constant dense<0.000000e+00> : vector<8xf32>
    %11 = vector.multi_reduction <add>, %10, %cst_7 [1] : vector<8x32xf32> to vector<8xf32>
    %12 = vector.shape_cast %11 : vector<8xf32> to vector<8x1xf32>
    %cst_8 = arith.constant 3.200000e+01 : f32
    %13 = vector.broadcast %cst_8 : f32 to vector<8x1xf32>
    %14 = arith.divf %12, %13 : vector<8x1xf32>
    %cst_9 = arith.constant 9.99999996E-13 : f32
    %15 = vector.broadcast %cst_9 : f32 to vector<8x1xf32>
    %16 = arith.addf %14, %15 : vector<8x1xf32>
    %17 = math.rsqrt %16 : vector<8x1xf32>
    %18 = vector.broadcast %17 : vector<8x1xf32> to vector<8x32xf32>
    %19 = arith.mulf %9, %18 : vector<8x32xf32>
    %20 = vector.broadcast %2 : vector<1x32xf32> to vector<8x32xf32>
    %21 = arith.mulf %19, %20 : vector<8x32xf32>
    %22 = vector.broadcast %3 : vector<1x32xf32> to vector<8x32xf32>
    %23 = arith.addf %21, %22 : vector<8x32xf32>
    %c0_10 = arith.constant 0 : index
    %c0_11 = arith.constant 0 : index
    %c0_12 = arith.constant 0 : index
    %24 = vector.load %arg2[%c0_10, %c0_11, %c0_12] : memref<1x1x8xf32, #tpu.memory_space<vmem>>, vector<1x1x8xf32>
    %25 = vector.shape_cast %24 : vector<1x1x8xf32> to vector<1x8xf32>
    %cst_13 = arith.constant 1.000000e+00 : f32
    %26 = vector.broadcast %cst_13 : f32 to vector<1x8xf32>
    %27 = arith.subf %25, %26 : vector<1x8xf32>
    %cst_14 = arith.constant 1.000000e+09 : f32
    %28 = vector.broadcast %cst_14 : f32 to vector<1x8xf32>
    %29 = arith.mulf %27, %28 : vector<1x8xf32>
    %c0_15 = arith.constant 0 : index
    %c0_16 = arith.constant 0 : index
    %c0_17 = arith.constant 0 : index
    %30 = vector.load %arg5[%c0_15, %c0_16, %c0_17] : memref<2x32x96xf32, #tpu.memory_space<vmem>>, vector<1x32x96xf32>
    %31 = vector.shape_cast %30 : vector<1x32x96xf32> to vector<32x96xf32>
    %cst_18 = arith.constant dense<0.000000e+00> : vector<8x96xf32>
    %32 = tpu.matmul %23, %31, %cst_18 {dimension_numbers = #tpu.dot_dimension_numbers<[1], [0], [0], [1], [0, 0, 1, 1], [], []>} : vector<8x32xf32>, vector<32x96xf32>, vector<8x96xf32> -> vector<8x96xf32>
    %c0_19 = arith.constant 0 : index
    %c0_20 = arith.constant 0 : index
    %c0_21 = arith.constant 0 : index
    %33 = vector.load %arg6[%c0_19, %c0_20, %c0_21] : memref<2x1x96xf32, #tpu.memory_space<vmem>>, vector<1x1x96xf32>
    %34 = vector.shape_cast %33 : vector<1x1x96xf32> to vector<1x96xf32>
    %35 = vector.broadcast %34 : vector<1x96xf32> to vector<8x96xf32>
    %36 = arith.addf %32, %35 : vector<8x96xf32>
    %37 = vector.extract_strided_slice %36 {offsets = [0, 0], sizes = [8, 16], strides = [1, 1]} : vector<8x96xf32> to vector<8x16xf32>
    %38 = vector.extract_strided_slice %36 {offsets = [0, 32], sizes = [8, 16], strides = [1, 1]} : vector<8x96xf32> to vector<8x16xf32>
    %39 = vector.extract_strided_slice %36 {offsets = [0, 64], sizes = [8, 16], strides = [1, 1]} : vector<8x96xf32> to vector<8x16xf32>
    %40 = tpu.transpose %38, [1, 0] : vector<8x16xf32> -> vector<16x8xf32>
    %cst_22 = arith.constant dense<0.000000e+00> : vector<8x8xf32>
    %41 = tpu.matmul %37, %40, %cst_22 {dimension_numbers = #tpu.dot_dimension_numbers<[1], [0], [0], [1], [0, 0, 1, 1], [], []>} : vector<8x16xf32>, vector<16x8xf32>, vector<8x8xf32> -> vector<8x8xf32>
    %cst_23 = arith.constant 2.500000e-01 : f32
    %42 = vector.broadcast %cst_23 : f32 to vector<8x8xf32>
    %43 = arith.mulf %41, %42 : vector<8x8xf32>
    %44 = vector.broadcast %29 : vector<1x8xf32> to vector<8x8xf32>
    %45 = arith.addf %43, %44 : vector<8x8xf32>
    %cst_24 = arith.constant dense<0xFF800000> : vector<8xf32>
    %46 = vector.multi_reduction <maximumf>, %45, %cst_24 [1] : vector<8x8xf32> to vector<8xf32>
    %47 = vector.shape_cast %46 : vector<8xf32> to vector<8x1xf32>
    %48 = vector.broadcast %47 : vector<8x1xf32> to vector<8x8xf32>
    %49 = arith.subf %45, %48 : vector<8x8xf32>
    %50 = math.exp %49 : vector<8x8xf32>
    %cst_25 = arith.constant dense<0.000000e+00> : vector<8xf32>
    %51 = vector.multi_reduction <add>, %50, %cst_25 [1] : vector<8x8xf32> to vector<8xf32>
    %52 = vector.shape_cast %51 : vector<8xf32> to vector<8x1xf32>
    %53 = tpu.reciprocal %52 {approx = true} : vector<8x1xf32> -> vector<8x1xf32>
    %54 = vector.broadcast %53 : vector<8x1xf32> to vector<8x8xf32>
    %55 = arith.mulf %50, %54 : vector<8x8xf32>
    %cst_26 = arith.constant dense<0.000000e+00> : vector<8x16xf32>
    %56 = tpu.matmul %55, %39, %cst_26 {dimension_numbers = #tpu.dot_dimension_numbers<[1], [0], [0], [1], [0, 0, 1, 1], [], []>} : vector<8x8xf32>, vector<8x16xf32>, vector<8x16xf32> -> vector<8x16xf32>
    %57 = vector.extract_strided_slice %36 {offsets = [0, 16], sizes = [8, 16], strides = [1, 1]} : vector<8x96xf32> to vector<8x16xf32>
    %58 = vector.extract_strided_slice %36 {offsets = [0, 48], sizes = [8, 16], strides = [1, 1]} : vector<8x96xf32> to vector<8x16xf32>
    %59 = vector.extract_strided_slice %36 {offsets = [0, 80], sizes = [8, 16], strides = [1, 1]} : vector<8x96xf32> to vector<8x16xf32>
    %60 = tpu.transpose %58, [1, 0] : vector<8x16xf32> -> vector<16x8xf32>
    %cst_27 = arith.constant dense<0.000000e+00> : vector<8x8xf32>
    %61 = tpu.matmul %57, %60, %cst_27 {dimension_numbers = #tpu.dot_dimension_numbers<[1], [0], [0], [1], [0, 0, 1, 1], [], []>} : vector<8x16xf32>, vector<16x8xf32>, vector<8x8xf32> -> vector<8x8xf32>
    %cst_28 = arith.constant 2.500000e-01 : f32
    %62 = vector.broadcast %cst_28 : f32 to vector<8x8xf32>
    %63 = arith.mulf %61, %62 : vector<8x8xf32>
    %64 = vector.broadcast %29 : vector<1x8xf32> to vector<8x8xf32>
    %65 = arith.addf %63, %64 : vector<8x8xf32>
    %cst_29 = arith.constant dense<0xFF800000> : vector<8xf32>
    %66 = vector.multi_reduction <maximumf>, %65, %cst_29 [1] : vector<8x8xf32> to vector<8xf32>
    %67 = vector.shape_cast %66 : vector<8xf32> to vector<8x1xf32>
    %68 = vector.broadcast %67 : vector<8x1xf32> to vector<8x8xf32>
    %69 = arith.subf %65, %68 : vector<8x8xf32>
    %70 = math.exp %69 : vector<8x8xf32>
    %cst_30 = arith.constant dense<0.000000e+00> : vector<8xf32>
    %71 = vector.multi_reduction <add>, %70, %cst_30 [1] : vector<8x8xf32> to vector<8xf32>
    %72 = vector.shape_cast %71 : vector<8xf32> to vector<8x1xf32>
    %73 = tpu.reciprocal %72 {approx = true} : vector<8x1xf32> -> vector<8x1xf32>
    %74 = vector.broadcast %73 : vector<8x1xf32> to vector<8x8xf32>
    %75 = arith.mulf %70, %74 : vector<8x8xf32>
    %cst_31 = arith.constant dense<0.000000e+00> : vector<8x16xf32>
    %76 = tpu.matmul %75, %59, %cst_31 {dimension_numbers = #tpu.dot_dimension_numbers<[1], [0], [0], [1], [0, 0, 1, 1], [], []>} : vector<8x8xf32>, vector<8x16xf32>, vector<8x16xf32> -> vector<8x16xf32>
    %77 = tpu.concatenate %56, %76 in 1 : vector<8x16xf32>, vector<8x16xf32> -> vector<8x32xf32>
    %c0_32 = arith.constant 0 : index
    %c0_33 = arith.constant 0 : index
    %c0_34 = arith.constant 0 : index
    %78 = vector.load %arg7[%c0_32, %c0_33, %c0_34] : memref<2x32x32xf32, #tpu.memory_space<vmem>>, vector<1x32x32xf32>
    %79 = vector.shape_cast %78 : vector<1x32x32xf32> to vector<32x32xf32>
    %cst_35 = arith.constant dense<0.000000e+00> : vector<8x32xf32>
    %80 = tpu.matmul %77, %79, %cst_35 {dimension_numbers = #tpu.dot_dimension_numbers<[1], [0], [0], [1], [0, 0, 1, 1], [], []>} : vector<8x32xf32>, vector<32x32xf32>, vector<8x32xf32> -> vector<8x32xf32>
    %c0_36 = arith.constant 0 : index
    %c0_37 = arith.constant 0 : index
    %c0_38 = arith.constant 0 : index
    %81 = vector.load %arg8[%c0_36, %c0_37, %c0_38] : memref<2x1x32xf32, #tpu.memory_space<vmem>>, vector<1x1x32xf32>
    %82 = vector.shape_cast %81 : vector<1x1x32xf32> to vector<1x32xf32>
    %83 = vector.broadcast %82 : vector<1x32xf32> to vector<8x32xf32>
    %84 = arith.addf %80, %83 : vector<8x32xf32>
    %85 = arith.addf %84, %23 : vector<8x32xf32>
    %c0_39 = arith.constant 0 : index
    %c0_40 = arith.constant 0 : index
    %c0_41 = arith.constant 0 : index
    %86 = vector.load %arg9[%c0_39, %c0_40, %c0_41] : memref<2x1x32xf32, #tpu.memory_space<vmem>>, vector<1x1x32xf32>
    %87 = vector.shape_cast %86 : vector<1x1x32xf32> to vector<1x32xf32>
    %c0_42 = arith.constant 0 : index
    %c0_43 = arith.constant 0 : index
    %c0_44 = arith.constant 0 : index
    %88 = vector.load %arg10[%c0_42, %c0_43, %c0_44] : memref<2x1x32xf32, #tpu.memory_space<vmem>>, vector<1x1x32xf32>
    %89 = vector.shape_cast %88 : vector<1x1x32xf32> to vector<1x32xf32>
    %cst_45 = arith.constant dense<0.000000e+00> : vector<8xf32>
    %90 = vector.multi_reduction <add>, %85, %cst_45 [1] : vector<8x32xf32> to vector<8xf32>
    %91 = vector.shape_cast %90 : vector<8xf32> to vector<8x1xf32>
    %cst_46 = arith.constant 3.200000e+01 : f32
    %92 = vector.broadcast %cst_46 : f32 to vector<8x1xf32>
    %93 = arith.divf %91, %92 : vector<8x1xf32>
    %94 = vector.broadcast %93 : vector<8x1xf32> to vector<8x32xf32>
    %95 = arith.subf %85, %94 : vector<8x32xf32>
    %96 = arith.mulf %95, %95 : vector<8x32xf32>
    %cst_47 = arith.constant dense<0.000000e+00> : vector<8xf32>
    %97 = vector.multi_reduction <add>, %96, %cst_47 [1] : vector<8x32xf32> to vector<8xf32>
    %98 = vector.shape_cast %97 : vector<8xf32> to vector<8x1xf32>
    %cst_48 = arith.constant 3.200000e+01 : f32
    %99 = vector.broadcast %cst_48 : f32 to vector<8x1xf32>
    %100 = arith.divf %98, %99 : vector<8x1xf32>
    %cst_49 = arith.constant 9.99999996E-13 : f32
    %101 = vector.broadcast %cst_49 : f32 to vector<8x1xf32>
    %102 = arith.addf %100, %101 : vector<8x1xf32>
    %103 = math.rsqrt %102 : vector<8x1xf32>
    %104 = vector.broadcast %103 : vector<8x1xf32> to vector<8x32xf32>
    %105 = arith.mulf %95, %104 : vector<8x32xf32>
    %106 = vector.broadcast %87 : vector<1x32xf32> to vector<8x32xf32>
    %107 = arith.mulf %105, %106 : vector<8x32xf32>
    %108 = vector.broadcast %89 : vector<1x32xf32> to vector<8x32xf32>
    %109 = arith.addf %107, %108 : vector<8x32xf32>
    %c0_50 = arith.constant 0 : index
    %c0_51 = arith.constant 0 : index
    %c0_52 = arith.constant 0 : index
    %110 = vector.load %arg11[%c0_50, %c0_51, %c0_52] : memref<2x32x64xf32, #tpu.memory_space<vmem>>, vector<1x32x64xf32>
    %111 = vector.shape_cast %110 : vector<1x32x64xf32> to vector<32x64xf32>
    %cst_53 = arith.constant dense<0.000000e+00> : vector<8x64xf32>
    %112 = tpu.matmul %109, %111, %cst_53 {dimension_numbers = #tpu.dot_dimension_numbers<[1], [0], [0], [1], [0, 0, 1, 1], [], []>} : vector<8x32xf32>, vector<32x64xf32>, vector<8x64xf32> -> vector<8x64xf32>
    %c0_54 = arith.constant 0 : index
    %c0_55 = arith.constant 0 : index
    %c0_56 = arith.constant 0 : index
    %113 = vector.load %arg12[%c0_54, %c0_55, %c0_56] : memref<2x1x64xf32, #tpu.memory_space<vmem>>, vector<1x1x64xf32>
    %114 = vector.shape_cast %113 : vector<1x1x64xf32> to vector<1x64xf32>
    %115 = vector.broadcast %114 : vector<1x64xf32> to vector<8x64xf32>
    %116 = arith.addf %112, %115 : vector<8x64xf32>
    %cst_57 = arith.constant 5.000000e-01 : f32
    %117 = vector.broadcast %cst_57 : f32 to vector<8x64xf32>
    %118 = arith.mulf %117, %116 : vector<8x64xf32>
    %cst_58 = arith.constant 4.471500e-02 : f32
    %119 = vector.broadcast %cst_58 : f32 to vector<8x64xf32>
    %120 = arith.mulf %119, %116 : vector<8x64xf32>
    %121 = arith.mulf %120, %116 : vector<8x64xf32>
    %122 = arith.mulf %121, %116 : vector<8x64xf32>
    %123 = arith.addf %116, %122 : vector<8x64xf32>
    %cst_59 = arith.constant 0.797884583 : f32
    %124 = vector.broadcast %cst_59 : f32 to vector<8x64xf32>
    %125 = arith.mulf %124, %123 : vector<8x64xf32>
    %126 = math.tanh %125 : vector<8x64xf32>
    %cst_60 = arith.constant 1.000000e+00 : f32
    %127 = vector.broadcast %cst_60 : f32 to vector<8x64xf32>
    %128 = arith.addf %127, %126 : vector<8x64xf32>
    %129 = arith.mulf %118, %128 : vector<8x64xf32>
    %c0_61 = arith.constant 0 : index
    %c0_62 = arith.constant 0 : index
    %c0_63 = arith.constant 0 : index
    %130 = vector.load %arg13[%c0_61, %c0_62, %c0_63] : memref<2x64x32xf32, #tpu.memory_space<vmem>>, vector<1x64x32xf32>
    %131 = vector.shape_cast %130 : vector<1x64x32xf32> to vector<64x32xf32>
    %cst_64 = arith.constant dense<0.000000e+00> : vector<8x32xf32>
    %132 = tpu.matmul %129, %131, %cst_64 {dimension_numbers = #tpu.dot_dimension_numbers<[1], [0], [0], [1], [0, 0, 1, 1], [], []>} : vector<8x64xf32>, vector<64x32xf32>, vector<8x32xf32> -> vector<8x32xf32>
    %c0_65 = arith.constant 0 : index
    %c0_66 = arith.constant 0 : index
    %c0_67 = arith.constant 0 : index
    %133 = vector.load %arg14[%c0_65, %c0_66, %c0_67] : memref<2x1x32xf32, #tpu.memory_space<vmem>>, vector<1x1x32xf32>
    %134 = vector.shape_cast %133 : vector<1x1x32xf32> to vector<1x32xf32>
    %135 = vector.broadcast %134 : vector<1x32xf32> to vector<8x32xf32>
    %136 = arith.addf %132, %135 : vector<8x32xf32>
    %137 = arith.addf %136, %109 : vector<8x32xf32>
    %c0_68 = arith.constant 0 : index
    %c0_69 = arith.constant 0 : index
    %c0_70 = arith.constant 0 : index
    %138 = vector.load %arg15[%c0_68, %c0_69, %c0_70] : memref<2x1x32xf32, #tpu.memory_space<vmem>>, vector<1x1x32xf32>
    %139 = vector.shape_cast %138 : vector<1x1x32xf32> to vector<1x32xf32>
    %c0_71 = arith.constant 0 : index
    %c0_72 = arith.constant 0 : index
    %c0_73 = arith.constant 0 : index
    %140 = vector.load %arg16[%c0_71, %c0_72, %c0_73] : memref<2x1x32xf32, #tpu.memory_space<vmem>>, vector<1x1x32xf32>
    %141 = vector.shape_cast %140 : vector<1x1x32xf32> to vector<1x32xf32>
    %cst_74 = arith.constant dense<0.000000e+00> : vector<8xf32>
    %142 = vector.multi_reduction <add>, %137, %cst_74 [1] : vector<8x32xf32> to vector<8xf32>
    %143 = vector.shape_cast %142 : vector<8xf32> to vector<8x1xf32>
    %cst_75 = arith.constant 3.200000e+01 : f32
    %144 = vector.broadcast %cst_75 : f32 to vector<8x1xf32>
    %145 = arith.divf %143, %144 : vector<8x1xf32>
    %146 = vector.broadcast %145 : vector<8x1xf32> to vector<8x32xf32>
    %147 = arith.subf %137, %146 : vector<8x32xf32>
    %148 = arith.mulf %147, %147 : vector<8x32xf32>
    %cst_76 = arith.constant dense<0.000000e+00> : vector<8xf32>
    %149 = vector.multi_reduction <add>, %148, %cst_76 [1] : vector<8x32xf32> to vector<8xf32>
    %150 = vector.shape_cast %149 : vector<8xf32> to vector<8x1xf32>
    %cst_77 = arith.constant 3.200000e+01 : f32
    %151 = vector.broadcast %cst_77 : f32 to vector<8x1xf32>
    %152 = arith.divf %150, %151 : vector<8x1xf32>
    %cst_78 = arith.constant 9.99999996E-13 : f32
    %153 = vector.broadcast %cst_78 : f32 to vector<8x1xf32>
    %154 = arith.addf %152, %153 : vector<8x1xf32>
    %155 = math.rsqrt %154 : vector<8x1xf32>
    %156 = vector.broadcast %155 : vector<8x1xf32> to vector<8x32xf32>
    %157 = arith.mulf %147, %156 : vector<8x32xf32>
    %158 = vector.broadcast %139 : vector<1x32xf32> to vector<8x32xf32>
    %159 = arith.mulf %157, %158 : vector<8x32xf32>
    %160 = vector.broadcast %141 : vector<1x32xf32> to vector<8x32xf32>
    %161 = arith.addf %159, %160 : vector<8x32xf32>
    %c1 = arith.constant 1 : index
    %c0_79 = arith.constant 0 : index
    %c0_80 = arith.constant 0 : index
    %162 = vector.load %arg5[%c1, %c0_79, %c0_80] : memref<2x32x96xf32, #tpu.memory_space<vmem>>, vector<1x32x96xf32>
    %163 = vector.shape_cast %162 : vector<1x32x96xf32> to vector<32x96xf32>
    %cst_81 = arith.constant dense<0.000000e+00> : vector<8x96xf32>
    %164 = tpu.matmul %161, %163, %cst_81 {dimension_numbers = #tpu.dot_dimension_numbers<[1], [0], [0], [1], [0, 0, 1, 1], [], []>} : vector<8x32xf32>, vector<32x96xf32>, vector<8x96xf32> -> vector<8x96xf32>
    %c1_82 = arith.constant 1 : index
    %c0_83 = arith.constant 0 : index
    %c0_84 = arith.constant 0 : index
    %165 = vector.load %arg6[%c1_82, %c0_83, %c0_84] : memref<2x1x96xf32, #tpu.memory_space<vmem>>, vector<1x1x96xf32>
    %166 = vector.shape_cast %165 : vector<1x1x96xf32> to vector<1x96xf32>
    %167 = vector.broadcast %166 : vector<1x96xf32> to vector<8x96xf32>
    %168 = arith.addf %164, %167 : vector<8x96xf32>
    %169 = vector.extract_strided_slice %168 {offsets = [0, 0], sizes = [8, 16], strides = [1, 1]} : vector<8x96xf32> to vector<8x16xf32>
    %170 = vector.extract_strided_slice %168 {offsets = [0, 32], sizes = [8, 16], strides = [1, 1]} : vector<8x96xf32> to vector<8x16xf32>
    %171 = vector.extract_strided_slice %168 {offsets = [0, 64], sizes = [8, 16], strides = [1, 1]} : vector<8x96xf32> to vector<8x16xf32>
    %172 = tpu.transpose %170, [1, 0] : vector<8x16xf32> -> vector<16x8xf32>
    %cst_85 = arith.constant dense<0.000000e+00> : vector<8x8xf32>
    %173 = tpu.matmul %169, %172, %cst_85 {dimension_numbers = #tpu.dot_dimension_numbers<[1], [0], [0], [1], [0, 0, 1, 1], [], []>} : vector<8x16xf32>, vector<16x8xf32>, vector<8x8xf32> -> vector<8x8xf32>
    %cst_86 = arith.constant 2.500000e-01 : f32
    %174 = vector.broadcast %cst_86 : f32 to vector<8x8xf32>
    %175 = arith.mulf %173, %174 : vector<8x8xf32>
    %176 = vector.broadcast %29 : vector<1x8xf32> to vector<8x8xf32>
    %177 = arith.addf %175, %176 : vector<8x8xf32>
    %cst_87 = arith.constant dense<0xFF800000> : vector<8xf32>
    %178 = vector.multi_reduction <maximumf>, %177, %cst_87 [1] : vector<8x8xf32> to vector<8xf32>
    %179 = vector.shape_cast %178 : vector<8xf32> to vector<8x1xf32>
    %180 = vector.broadcast %179 : vector<8x1xf32> to vector<8x8xf32>
    %181 = arith.subf %177, %180 : vector<8x8xf32>
    %182 = math.exp %181 : vector<8x8xf32>
    %cst_88 = arith.constant dense<0.000000e+00> : vector<8xf32>
    %183 = vector.multi_reduction <add>, %182, %cst_88 [1] : vector<8x8xf32> to vector<8xf32>
    %184 = vector.shape_cast %183 : vector<8xf32> to vector<8x1xf32>
    %185 = tpu.reciprocal %184 {approx = true} : vector<8x1xf32> -> vector<8x1xf32>
    %186 = vector.broadcast %185 : vector<8x1xf32> to vector<8x8xf32>
    %187 = arith.mulf %182, %186 : vector<8x8xf32>
    %cst_89 = arith.constant dense<0.000000e+00> : vector<8x16xf32>
    %188 = tpu.matmul %187, %171, %cst_89 {dimension_numbers = #tpu.dot_dimension_numbers<[1], [0], [0], [1], [0, 0, 1, 1], [], []>} : vector<8x8xf32>, vector<8x16xf32>, vector<8x16xf32> -> vector<8x16xf32>
    %189 = vector.extract_strided_slice %168 {offsets = [0, 16], sizes = [8, 16], strides = [1, 1]} : vector<8x96xf32> to vector<8x16xf32>
    %190 = vector.extract_strided_slice %168 {offsets = [0, 48], sizes = [8, 16], strides = [1, 1]} : vector<8x96xf32> to vector<8x16xf32>
    %191 = vector.extract_strided_slice %168 {offsets = [0, 80], sizes = [8, 16], strides = [1, 1]} : vector<8x96xf32> to vector<8x16xf32>
    %192 = tpu.transpose %190, [1, 0] : vector<8x16xf32> -> vector<16x8xf32>
    %cst_90 = arith.constant dense<0.000000e+00> : vector<8x8xf32>
    %193 = tpu.matmul %189, %192, %cst_90 {dimension_numbers = #tpu.dot_dimension_numbers<[1], [0], [0], [1], [0, 0, 1, 1], [], []>} : vector<8x16xf32>, vector<16x8xf32>, vector<8x8xf32> -> vector<8x8xf32>
    %cst_91 = arith.constant 2.500000e-01 : f32
    %194 = vector.broadcast %cst_91 : f32 to vector<8x8xf32>
    %195 = arith.mulf %193, %194 : vector<8x8xf32>
    %196 = vector.broadcast %29 : vector<1x8xf32> to vector<8x8xf32>
    %197 = arith.addf %195, %196 : vector<8x8xf32>
    %cst_92 = arith.constant dense<0xFF800000> : vector<8xf32>
    %198 = vector.multi_reduction <maximumf>, %197, %cst_92 [1] : vector<8x8xf32> to vector<8xf32>
    %199 = vector.shape_cast %198 : vector<8xf32> to vector<8x1xf32>
    %200 = vector.broadcast %199 : vector<8x1xf32> to vector<8x8xf32>
    %201 = arith.subf %197, %200 : vector<8x8xf32>
    %202 = math.exp %201 : vector<8x8xf32>
    %cst_93 = arith.constant dense<0.000000e+00> : vector<8xf32>
    %203 = vector.multi_reduction <add>, %202, %cst_93 [1] : vector<8x8xf32> to vector<8xf32>
    %204 = vector.shape_cast %203 : vector<8xf32> to vector<8x1xf32>
    %205 = tpu.reciprocal %204 {approx = true} : vector<8x1xf32> -> vector<8x1xf32>
    %206 = vector.broadcast %205 : vector<8x1xf32> to vector<8x8xf32>
    %207 = arith.mulf %202, %206 : vector<8x8xf32>
    %cst_94 = arith.constant dense<0.000000e+00> : vector<8x16xf32>
    %208 = tpu.matmul %207, %191, %cst_94 {dimension_numbers = #tpu.dot_dimension_numbers<[1], [0], [0], [1], [0, 0, 1, 1], [], []>} : vector<8x8xf32>, vector<8x16xf32>, vector<8x16xf32> -> vector<8x16xf32>
    %209 = tpu.concatenate %188, %208 in 1 : vector<8x16xf32>, vector<8x16xf32> -> vector<8x32xf32>
    %c1_95 = arith.constant 1 : index
    %c0_96 = arith.constant 0 : index
    %c0_97 = arith.constant 0 : index
    %210 = vector.load %arg7[%c1_95, %c0_96, %c0_97] : memref<2x32x32xf32, #tpu.memory_space<vmem>>, vector<1x32x32xf32>
    %211 = vector.shape_cast %210 : vector<1x32x32xf32> to vector<32x32xf32>
    %cst_98 = arith.constant dense<0.000000e+00> : vector<8x32xf32>
    %212 = tpu.matmul %209, %211, %cst_98 {dimension_numbers = #tpu.dot_dimension_numbers<[1], [0], [0], [1], [0, 0, 1, 1], [], []>} : vector<8x32xf32>, vector<32x32xf32>, vector<8x32xf32> -> vector<8x32xf32>
    %c1_99 = arith.constant 1 : index
    %c0_100 = arith.constant 0 : index
    %c0_101 = arith.constant 0 : index
    %213 = vector.load %arg8[%c1_99, %c0_100, %c0_101] : memref<2x1x32xf32, #tpu.memory_space<vmem>>, vector<1x1x32xf32>
    %214 = vector.shape_cast %213 : vector<1x1x32xf32> to vector<1x32xf32>
    %215 = vector.broadcast %214 : vector<1x32xf32> to vector<8x32xf32>
    %216 = arith.addf %212, %215 : vector<8x32xf32>
    %217 = arith.addf %216, %161 : vector<8x32xf32>
    %c1_102 = arith.constant 1 : index
    %c0_103 = arith.constant 0 : index
    %c0_104 = arith.constant 0 : index
    %218 = vector.load %arg9[%c1_102, %c0_103, %c0_104] : memref<2x1x32xf32, #tpu.memory_space<vmem>>, vector<1x1x32xf32>
    %219 = vector.shape_cast %218 : vector<1x1x32xf32> to vector<1x32xf32>
    %c1_105 = arith.constant 1 : index
    %c0_106 = arith.constant 0 : index
    %c0_107 = arith.constant 0 : index
    %220 = vector.load %arg10[%c1_105, %c0_106, %c0_107] : memref<2x1x32xf32, #tpu.memory_space<vmem>>, vector<1x1x32xf32>
    %221 = vector.shape_cast %220 : vector<1x1x32xf32> to vector<1x32xf32>
    %cst_108 = arith.constant dense<0.000000e+00> : vector<8xf32>
    %222 = vector.multi_reduction <add>, %217, %cst_108 [1] : vector<8x32xf32> to vector<8xf32>
    %223 = vector.shape_cast %222 : vector<8xf32> to vector<8x1xf32>
    %cst_109 = arith.constant 3.200000e+01 : f32
    %224 = vector.broadcast %cst_109 : f32 to vector<8x1xf32>
    %225 = arith.divf %223, %224 : vector<8x1xf32>
    %226 = vector.broadcast %225 : vector<8x1xf32> to vector<8x32xf32>
    %227 = arith.subf %217, %226 : vector<8x32xf32>
    %228 = arith.mulf %227, %227 : vector<8x32xf32>
    %cst_110 = arith.constant dense<0.000000e+00> : vector<8xf32>
    %229 = vector.multi_reduction <add>, %228, %cst_110 [1] : vector<8x32xf32> to vector<8xf32>
    %230 = vector.shape_cast %229 : vector<8xf32> to vector<8x1xf32>
    %cst_111 = arith.constant 3.200000e+01 : f32
    %231 = vector.broadcast %cst_111 : f32 to vector<8x1xf32>
    %232 = arith.divf %230, %231 : vector<8x1xf32>
    %cst_112 = arith.constant 9.99999996E-13 : f32
    %233 = vector.broadcast %cst_112 : f32 to vector<8x1xf32>
    %234 = arith.addf %232, %233 : vector<8x1xf32>
    %235 = math.rsqrt %234 : vector<8x1xf32>
    %236 = vector.broadcast %235 : vector<8x1xf32> to vector<8x32xf32>
    %237 = arith.mulf %227, %236 : vector<8x32xf32>
    %238 = vector.broadcast %219 : vector<1x32xf32> to vector<8x32xf32>
    %239 = arith.mulf %237, %238 : vector<8x32xf32>
    %240 = vector.broadcast %221 : vector<1x32xf32> to vector<8x32xf32>
    %241 = arith.addf %239, %240 : vector<8x32xf32>
    %c1_113 = arith.constant 1 : index
    %c0_114 = arith.constant 0 : index
    %c0_115 = arith.constant 0 : index
    %242 = vector.load %arg11[%c1_113, %c0_114, %c0_115] : memref<2x32x64xf32, #tpu.memory_space<vmem>>, vector<1x32x64xf32>
    %243 = vector.shape_cast %242 : vector<1x32x64xf32> to vector<32x64xf32>
    %cst_116 = arith.constant dense<0.000000e+00> : vector<8x64xf32>
    %244 = tpu.matmul %241, %243, %cst_116 {dimension_numbers = #tpu.dot_dimension_numbers<[1], [0], [0], [1], [0, 0, 1, 1], [], []>} : vector<8x32xf32>, vector<32x64xf32>, vector<8x64xf32> -> vector<8x64xf32>
    %c1_117 = arith.constant 1 : index
    %c0_118 = arith.constant 0 : index
    %c0_119 = arith.constant 0 : index
    %245 = vector.load %arg12[%c1_117, %c0_118, %c0_119] : memref<2x1x64xf32, #tpu.memory_space<vmem>>, vector<1x1x64xf32>
    %246 = vector.shape_cast %245 : vector<1x1x64xf32> to vector<1x64xf32>
    %247 = vector.broadcast %246 : vector<1x64xf32> to vector<8x64xf32>
    %248 = arith.addf %244, %247 : vector<8x64xf32>
    %cst_120 = arith.constant 5.000000e-01 : f32
    %249 = vector.broadcast %cst_120 : f32 to vector<8x64xf32>
    %250 = arith.mulf %249, %248 : vector<8x64xf32>
    %cst_121 = arith.constant 4.471500e-02 : f32
    %251 = vector.broadcast %cst_121 : f32 to vector<8x64xf32>
    %252 = arith.mulf %251, %248 : vector<8x64xf32>
    %253 = arith.mulf %252, %248 : vector<8x64xf32>
    %254 = arith.mulf %253, %248 : vector<8x64xf32>
    %255 = arith.addf %248, %254 : vector<8x64xf32>
    %cst_122 = arith.constant 0.797884583 : f32
    %256 = vector.broadcast %cst_122 : f32 to vector<8x64xf32>
    %257 = arith.mulf %256, %255 : vector<8x64xf32>
    %258 = math.tanh %257 : vector<8x64xf32>
    %cst_123 = arith.constant 1.000000e+00 : f32
    %259 = vector.broadcast %cst_123 : f32 to vector<8x64xf32>
    %260 = arith.addf %259, %258 : vector<8x64xf32>
    %261 = arith.mulf %250, %260 : vector<8x64xf32>
    %c1_124 = arith.constant 1 : index
    %c0_125 = arith.constant 0 : index
    %c0_126 = arith.constant 0 : index
    %262 = vector.load %arg13[%c1_124, %c0_125, %c0_126] : memref<2x64x32xf32, #tpu.memory_space<vmem>>, vector<1x64x32xf32>
    %263 = vector.shape_cast %262 : vector<1x64x32xf32> to vector<64x32xf32>
    %cst_127 = arith.constant dense<0.000000e+00> : vector<8x32xf32>
    %264 = tpu.matmul %261, %263, %cst_127 {dimension_numbers = #tpu.dot_dimension_numbers<[1], [0], [0], [1], [0, 0, 1, 1], [], []>} : vector<8x64xf32>, vector<64x32xf32>, vector<8x32xf32> -> vector<8x32xf32>
    %c1_128 = arith.constant 1 : index
    %c0_129 = arith.constant 0 : index
    %c0_130 = arith.constant 0 : index
    %265 = vector.load %arg14[%c1_128, %c0_129, %c0_130] : memref<2x1x32xf32, #tpu.memory_space<vmem>>, vector<1x1x32xf32>
    %266 = vector.shape_cast %265 : vector<1x1x32xf32> to vector<1x32xf32>
    %267 = vector.broadcast %266 : vector<1x32xf32> to vector<8x32xf32>
    %268 = arith.addf %264, %267 : vector<8x32xf32>
    %269 = arith.addf %268, %241 : vector<8x32xf32>
    %c1_131 = arith.constant 1 : index
    %c0_132 = arith.constant 0 : index
    %c0_133 = arith.constant 0 : index
    %270 = vector.load %arg15[%c1_131, %c0_132, %c0_133] : memref<2x1x32xf32, #tpu.memory_space<vmem>>, vector<1x1x32xf32>
    %271 = vector.shape_cast %270 : vector<1x1x32xf32> to vector<1x32xf32>
    %c1_134 = arith.constant 1 : index
    %c0_135 = arith.constant 0 : index
    %c0_136 = arith.constant 0 : index
    %272 = vector.load %arg16[%c1_134, %c0_135, %c0_136] : memref<2x1x32xf32, #tpu.memory_space<vmem>>, vector<1x1x32xf32>
    %273 = vector.shape_cast %272 : vector<1x1x32xf32> to vector<1x32xf32>
    %cst_137 = arith.constant dense<0.000000e+00> : vector<8xf32>
    %274 = vector.multi_reduction <add>, %269, %cst_137 [1] : vector<8x32xf32> to vector<8xf32>
    %275 = vector.shape_cast %274 : vector<8xf32> to vector<8x1xf32>
    %cst_138 = arith.constant 3.200000e+01 : f32
    %276 = vector.broadcast %cst_138 : f32 to vector<8x1xf32>
    %277 = arith.divf %275, %276 : vector<8x1xf32>
    %278 = vector.broadcast %277 : vector<8x1xf32> to vector<8x32xf32>
    %279 = arith.subf %269, %278 : vector<8x32xf32>
    %280 = arith.mulf %279, %279 : vector<8x32xf32>
    %cst_139 = arith.constant dense<0.000000e+00> : vector<8xf32>
    %281 = vector.multi_reduction <add>, %280, %cst_139 [1] : vector<8x32xf32> to vector<8xf32>
    %282 = vector.shape_cast %281 : vector<8xf32> to vector<8x1xf32>
    %cst_140 = arith.constant 3.200000e+01 : f32
    %283 = vector.broadcast %cst_140 : f32 to vector<8x1xf32>
    %284 = arith.divf %282, %283 : vector<8x1xf32>
    %cst_141 = arith.constant 9.99999996E-13 : f32
    %285 = vector.broadcast %cst_141 : f32 to vector<8x1xf32>
    %286 = arith.addf %284, %285 : vector<8x1xf32>
    %287 = math.rsqrt %286 : vector<8x1xf32>
    %288 = vector.broadcast %287 : vector<8x1xf32> to vector<8x32xf32>
    %289 = arith.mulf %279, %288 : vector<8x32xf32>
    %290 = vector.broadcast %271 : vector<1x32xf32> to vector<8x32xf32>
    %291 = arith.mulf %289, %290 : vector<8x32xf32>
    %292 = vector.broadcast %273 : vector<1x32xf32> to vector<8x32xf32>
    %293 = arith.addf %291, %292 : vector<8x32xf32>
    %294 = vector.extract_strided_slice %293 {offsets = [0, 0], sizes = [1, 32], strides = [1, 1]} : vector<8x32xf32> to vector<1x32xf32>
    %c0_142 = arith.constant 0 : index
    %c0_143 = arith.constant 0 : index
    %295 = vector.load %arg17[%c0_142, %c0_143] : memref<1x32xf32, #tpu.memory_space<vmem>>, vector<1x32xf32>
    %296 = arith.mulf %294, %295 : vector<1x32xf32>
    %cst_144 = arith.constant dense<0.000000e+00> : vector<1xf32>
    %297 = vector.multi_reduction <add>, %296, %cst_144 [1] : vector<1x32xf32> to vector<1xf32>
    %298 = vector.shape_cast %297 : vector<1xf32> to vector<1x1xf32>
    %c0_145 = arith.constant 0 : index
    %c0_146 = arith.constant 0 : index
    %299 = vector.load %arg18[%c0_145, %c0_146] : memref<1x1xf32, #tpu.memory_space<vmem>>, vector<1x1xf32>
    %300 = arith.addf %298, %299 : vector<1x1xf32>
    %cst_147 = arith.constant 0.000000e+00 : f32
    %301 = vector.broadcast %cst_147 : f32 to vector<1x1xf32>
    %302 = arith.subf %301, %300 : vector<1x1xf32>
    %303 = math.exp %302 : vector<1x1xf32>
    %cst_148 = arith.constant 1.000000e+00 : f32
    %304 = vector.broadcast %cst_148 : f32 to vector<1x1xf32>
    %305 = arith.addf %304, %303 : vector<1x1xf32>
    %cst_149 = arith.constant 1.000000e+00 : f32
    %306 = vector.broadcast %cst_149 : f32 to vector<1x1xf32>
    %307 = arith.divf %306, %305 : vector<1x1xf32>
    %c0_150 = arith.constant 0 : index
    %c0_151 = arith.constant 0 : index
    %c0_152 = arith.constant 0 : index
    %308 = vector.load %arg19[%c0_150, %c0_151, %c0_152] : memref<1x1x1xf32, #tpu.memory_space<vmem>>, vector<1x1x1xf32>
    %309 = vector.shape_cast %308 : vector<1x1x1xf32> to vector<1x1xf32>
    %310 = vector.shape_cast %307 : vector<1x1xf32> to vector<1x1x1xf32>
    tpu.vector_store %arg19[%c0_150, %c0_151, %c0_152], %310 {strides = array<i32>} : memref<1x1x1xf32, #tpu.memory_space<vmem>>, vector<1x1x1xf32>,
    return
  }
  func.func @transform_0(%arg0: i32) -> (i32, i32, i32) {
    %c0_i32 = arith.constant 0 : i32
    %c0_i32_0 = arith.constant 0 : i32
    %c0_i32_1 = arith.constant 0 : i32
    return %arg0, %c0_i32, %c0_i32_0 : i32, i32, i32
  }
  func.func @transform_1(%arg0: i32) -> (i32, i32, i32) {
    %c0_i32 = arith.constant 0 : i32
    %c0_i32_0 = arith.constant 0 : i32
    %c0_i32_1 = arith.constant 0 : i32
    return %arg0, %c0_i32, %c0_i32_0 : i32, i32, i32
  }
  func.func @transform_2(%arg0: i32) -> (i32, i32) {
    %c0_i32 = arith.constant 0 : i32
    %c0_i32_0 = arith.constant 0 : i32
    %c0_i32_1 = arith.constant 0 : i32
    return %c0_i32, %c0_i32_0 : i32, i32
  }
  func.func @transform_3(%arg0: i32) -> (i32, i32) {
    %c0_i32 = arith.constant 0 : i32
    %c0_i32_0 = arith.constant 0 : i32
    %c0_i32_1 = arith.constant 0 : i32
    return %c0_i32, %c0_i32_0 : i32, i32
  }
  func.func @transform_4(%arg0: i32) -> (i32, i32, i32) {
    %c0_i32 = arith.constant 0 : i32
    %c0_i32_0 = arith.constant 0 : i32
    %c0_i32_1 = arith.constant 0 : i32
    %c0_i32_2 = arith.constant 0 : i32
    return %c0_i32, %c0_i32_0, %c0_i32_1 : i32, i32, i32
  }
  func.func @transform_5(%arg0: i32) -> (i32, i32, i32) {
    %c0_i32 = arith.constant 0 : i32
    %c0_i32_0 = arith.constant 0 : i32
    %c0_i32_1 = arith.constant 0 : i32
    %c0_i32_2 = arith.constant 0 : i32
    return %c0_i32, %c0_i32_0, %c0_i32_1 : i32, i32, i32
  }
  func.func @transform_6(%arg0: i32) -> (i32, i32, i32) {
    %c0_i32 = arith.constant 0 : i32
    %c0_i32_0 = arith.constant 0 : i32
    %c0_i32_1 = arith.constant 0 : i32
    %c0_i32_2 = arith.constant 0 : i32
    return %c0_i32, %c0_i32_0, %c0_i32_1 : i32, i32, i32
  }
  func.func @transform_7(%arg0: i32) -> (i32, i32, i32) {
    %c0_i32 = arith.constant 0 : i32
    %c0_i32_0 = arith.constant 0 : i32
    %c0_i32_1 = arith.constant 0 : i32
    %c0_i32_2 = arith.constant 0 : i32
    return %c0_i32, %c0_i32_0, %c0_i32_1 : i32, i32, i32
  }
  func.func @transform_8(%arg0: i32) -> (i32, i32, i32) {
    %c0_i32 = arith.constant 0 : i32
    %c0_i32_0 = arith.constant 0 : i32
    %c0_i32_1 = arith.constant 0 : i32
    %c0_i32_2 = arith.constant 0 : i32
    return %c0_i32, %c0_i32_0, %c0_i32_1 : i32, i32, i32
  }
  func.func @transform_9(%arg0: i32) -> (i32, i32, i32) {
    %c0_i32 = arith.constant 0 : i32
    %c0_i32_0 = arith.constant 0 : i32
    %c0_i32_1 = arith.constant 0 : i32
    %c0_i32_2 = arith.constant 0 : i32
    return %c0_i32, %c0_i32_0, %c0_i32_1 : i32, i32, i32
  }
  func.func @transform_10(%arg0: i32) -> (i32, i32, i32) {
    %c0_i32 = arith.constant 0 : i32
    %c0_i32_0 = arith.constant 0 : i32
    %c0_i32_1 = arith.constant 0 : i32
    %c0_i32_2 = arith.constant 0 : i32
    return %c0_i32, %c0_i32_0, %c0_i32_1 : i32, i32, i32
  }
  func.func @transform_11(%arg0: i32) -> (i32, i32, i32) {
    %c0_i32 = arith.constant 0 : i32
    %c0_i32_0 = arith.constant 0 : i32
    %c0_i32_1 = arith.constant 0 : i32
    %c0_i32_2 = arith.constant 0 : i32
    return %c0_i32, %c0_i32_0, %c0_i32_1 : i32, i32, i32
  }
  func.func @transform_12(%arg0: i32) -> (i32, i32, i32) {
    %c0_i32 = arith.constant 0 : i32
    %c0_i32_0 = arith.constant 0 : i32
    %c0_i32_1 = arith.constant 0 : i32
    %c0_i32_2 = arith.constant 0 : i32
    return %c0_i32, %c0_i32_0, %c0_i32_1 : i32, i32, i32
  }
  func.func @transform_13(%arg0: i32) -> (i32, i32, i32) {
    %c0_i32 = arith.constant 0 : i32
    %c0_i32_0 = arith.constant 0 : i32
    %c0_i32_1 = arith.constant 0 : i32
    %c0_i32_2 = arith.constant 0 : i32
    return %c0_i32, %c0_i32_0, %c0_i32_1 : i32, i32, i32
  }
  func.func @transform_14(%arg0: i32) -> (i32, i32, i32) {
    %c0_i32 = arith.constant 0 : i32
    %c0_i32_0 = arith.constant 0 : i32
    %c0_i32_1 = arith.constant 0 : i32
    %c0_i32_2 = arith.constant 0 : i32
    return %c0_i32, %c0_i32_0, %c0_i32_1 : i32, i32, i32
  }
  func.func @transform_15(%arg0: i32) -> (i32, i32, i32) {
    %c0_i32 = arith.constant 0 : i32
    %c0_i32_0 = arith.constant 0 : i32
    %c0_i32_1 = arith.constant 0 : i32
    %c0_i32_2 = arith.constant 0 : i32
    return %c0_i32, %c0_i32_0, %c0_i32_1 : i32, i32, i32
  }
  func.func @transform_16(%arg0: i32) -> (i32, i32) {
    %c0_i32 = arith.constant 0 : i32
    %c0_i32_0 = arith.constant 0 : i32
    %c0_i32_1 = arith.constant 0 : i32
    return %c0_i32, %c0_i32_0 : i32, i32
  }
  func.func @transform_17(%arg0: i32) -> (i32, i32) {
    %c0_i32 = arith.constant 0 : i32
    %c0_i32_0 = arith.constant 0 : i32
    %c0_i32_1 = arith.constant 0 : i32
    return %c0_i32, %c0_i32_0 : i32, i32
  }
  func.func @transform_18(%arg0: i32) -> (i32, i32, i32) {
    %c0_i32 = arith.constant 0 : i32
    %c0_i32_0 = arith.constant 0 : i32
    %c0_i32_1 = arith.constant 0 : i32
    return %arg0, %c0_i32, %c0_i32_0 : i32, i32, i32
  }
}

</mosaic_0001>

<llo_original>
// kernel: tpu_custom_call.1
$region0: #{tpu_custom_call.1}
  #allocation0 [shape = 'u32[]', space=smem, size = 0x4, offset = 0x4, fixed_abs, tag = 'smem constant byte address 0x4 - core index']
  #allocation1 [shape = 'u32[72,128]{1,0:T(1,128)}', space=vmem, size = 0x9000, scoped, tag = 'internal scratch']
  #allocation2 [shape = 'f32[1,1]{1,0:T(1,128)S(1)}', space=vmem, size = 0x200, scoped, tag = 'scoped memory for tpu_custom_call.1']
  %s0 = inlined_call_operand.hbm [shape: f32[2,8,32], index: 0, kind: input, shape index: {}]
  %s1 = inlined_call_operand.vmem [shape: f32[2,1,8], index: 1, kind: input, shape index: {}]
  %s2 = inlined_call_operand.hbm [shape: f32[1,32], index: 2, kind: input, shape index: {}]
  %s3 = inlined_call_operand.hbm [shape: f32[1,32], index: 3, kind: input, shape index: {}]
  %s4 = inlined_call_operand.vmem [shape: f32[2,32,96], index: 4, kind: input, shape index: {}]
  %s5 = inlined_call_operand.vmem [shape: f32[2,1,96], index: 5, kind: input, shape index: {}]
  %s6 = inlined_call_operand.vmem [shape: f32[2,32,32], index: 6, kind: input, shape index: {}]
  %s7 = inlined_call_operand.vmem [shape: f32[2,1,32], index: 7, kind: input, shape index: {}]
  %s8 = inlined_call_operand.vmem [shape: f32[2,1,32], index: 8, kind: input, shape index: {}]
  %s9 = inlined_call_operand.hbm [shape: f32[2,1,32], index: 9, kind: input, shape index: {}]
  %s10 = inlined_call_operand.vmem [shape: f32[2,32,64], index: 10, kind: input, shape index: {}]
  %s11 = inlined_call_operand.vmem [shape: f32[2,1,64], index: 11, kind: input, shape index: {}]
  %s12 = inlined_call_operand.vmem [shape: f32[2,64,32], index: 12, kind: input, shape index: {}]
  %s13 = inlined_call_operand.vmem [shape: f32[2,1,32], index: 13, kind: input, shape index: {}]
  %s14 = inlined_call_operand.vmem [shape: f32[2,1,32], index: 14, kind: input, shape index: {}]
  %s15 = inlined_call_operand.hbm [shape: f32[2,1,32], index: 15, kind: input, shape index: {}]
  %s16 = inlined_call_operand.vmem [shape: f32[1,32], index: 16, kind: input, shape index: {}]
  %s17 = inlined_call_operand.<no memory space> [shape: f32[1,1], index: 17, kind: input, shape index: {}]
  %s18 = inlined_call_operand.vmem [shape: f32[2,1,1], index: 18, kind: output, shape index: {}]
  %s19 = sld [smem:[#allocation0]]
  $region125: #{tpu_custom_call.1} parent=0
    _
  %s21 = ssub.s32 1, %s19
  %s22 = scalar_select 0, %s21, %s19
  %v23 = vstv %s17
  %24 = vst [vmem:[#allocation2] sm:$0x1] %v23
  $region1: #{tpu_custom_call.1} parent=0
    #allocation3 [shape = 'u8[8192]{0}', space=vmem, size = 0x2000, scoped, tag = 'input window, operand 0']
    #allocation4 [shape = 's32[2]{0}', space=sflag, size = 0x8, scoped, tag = 'scoped memory for tpu_custom_call.1']
    #allocation5 [shape = 'u8[512]{0}', space=vmem, size = 0x400, scoped, tag = 'input window, operand 2, single buffered']
    #allocation6 [shape = 's32[1]{0}', space=sflag, size = 0x4, scoped, tag = 'scoped memory for tpu_custom_call.1']
    #allocation7 [shape = 'u8[512]{0}', space=vmem, size = 0x400, scoped, tag = 'input window, operand 3, single buffered']
    #allocation8 [shape = 'u8[1024]{0}', space=vmem, size = 0x400, scoped, tag = 'input window, operand 9, single buffered']
    #allocation9 [shape = 's32[1]{0}', space=sflag, size = 0x4, scoped, tag = 'scoped memory for tpu_custom_call.1']
    #allocation10 [shape = 'u8[1024]{0}', space=vmem, size = 0x400, scoped, tag = 'input window, operand 15, single buffered']
    %25 = vsyncpa [#allocation4], 0
    %s26 = scalar_lea.sflag [#allocation4], 1
    %27 = vsyncpa %s26, 0
    %28 = vsyncpa [#allocation6], 0
    %29 = vsyncpa [#allocation9], 0
    loop: start=0, step=1, limit=4
    $region2: #{tpu_custom_call.1} parent=1 // loop_pre_header
      _
    $region3: #{tpu_custom_call.1} parent=1 // loop_header
      %s31 = sphi 0, %s35
      %p32 = scmp.ge.s32.totalorder %s31, 4
      %s41 = sphi 0, %s43
      %s44 = sphi 0, %s41
      %s45 = sphi 0, %s44
      %s61 = sphi 0, %s45
      %s67 = sphi 0, %s69
      %s70 = sphi 0, %s67
      %s71 = sphi 0, %s70
      %s87 = sphi 0, %s71
      %s91 = sphi 0, %s91
      %s93 = sphi 0, %s91
      %s94 = sphi 0, %s93
      %s108 = sphi 0, %s94
      %s112 = sphi 0, %s112
      %s114 = sphi 0, %s112
      %s115 = sphi 0, %s114
      %s129 = sphi 0, %s115
      %s133 = sphi 0, %s133
      %s135 = sphi 0, %s133
      %s136 = sphi 0, %s135
      %s150 = sphi 0, %s136
      %s154 = sphi 0, %s154
      %s156 = sphi 0, %s154
      %s157 = sphi 0, %s156
      %s171 = sphi 0, %s157
      %s175 = sphi 0, %s175
      %s177 = sphi 0, %s175
      %s178 = sphi 0, %s177
      %s192 = sphi 0, %s178
      %s196 = sphi 0, %s196
      %s198 = sphi 0, %s196
      %s199 = sphi 0, %s198
      %s213 = sphi 0, %s199
      %s217 = sphi 0, %s217
      %s219 = sphi 0, %s217
      %s220 = sphi 0, %s219
      %s234 = sphi 0, %s220
      %s238 = sphi 0, %s238
      %s240 = sphi 0, %s238
      %s241 = sphi 0, %s240
      %s255 = sphi 0, %s241
      %s259 = sphi 0, %s259
      %s261 = sphi 0, %s259
      %s262 = sphi 0, %s261
      %s276 = sphi 0, %s262
      %s280 = sphi 0, %s280
      %s282 = sphi 0, %s280
      %s283 = sphi 0, %s282
      %s297 = sphi 0, %s283
      %s301 = sphi 0, %s301
      %s303 = sphi 0, %s301
      %s304 = sphi 0, %s303
      %s318 = sphi 0, %s304
      %s322 = sphi 0, %s322
      %s324 = sphi 0, %s322
      %s325 = sphi 0, %s324
      %s339 = sphi 0, %s325
      %s343 = sphi 0, %s343
      %s345 = sphi 0, %s343
      %s346 = sphi 0, %s345
      %s360 = sphi 0, %s346
      %s364 = sphi 0, %s364
      %s366 = sphi 0, %s364
      %s367 = sphi 0, %s366
      %s381 = sphi 0, %s367
      %s385 = sphi 0, %s385
      %s387 = sphi 0, %s385
      %s388 = sphi 0, %s387
      %s402 = sphi 0, %s388
      %s406 = sphi 0, %s406
      %s408 = sphi 0, %s406
      %s409 = sphi 0, %s408
      %s423 = sphi 0, %s409
      %s429 = sphi 0, %s431
      %s432 = sphi 0, %s429
      %s433 = sphi 0, %s432
      %s449 = sphi 0, %s433
    $region4: #{tpu_custom_call.1} parent=1 // loop_header_branch
      %34 = sbr.rel (%p32) target = $region8
    $region5: #{tpu_custom_call.1} parent=1 // loop_body
      %s36 = ssub.s32 %s31, 1
      %s37 = ssub.s32 %s31, 2
      %s38 = sadd.s32 %s31, 1
      %s39 = ssub.s32 %s31, %s38
      %p40 = scmp.eq.s32.totalorder %s39, 0
      %s42 = sadd.s32 %s41, 1
      %s43 = scalar_select %p40, %s41, %s42
      %p46 = pneg %p40
      %p47 = scmp.eq.s32.totalorder %s31, 1
      %p48 = por %p46, %p47
      %p49 = scmp.ne.s32.totalorder %s41, %s44
      %p50 = scmp.eq.s32.totalorder %s31, 0
      %p51 = por %p49, %p50
      %p52 = scmp.ne.s32.totalorder %s41, %s44
      %p53 = scmp.eq.s32.totalorder %s36, 1
      %p54 = por %p52, %p53
      %p55 = scmp.ne.s32.totalorder %s44, %s45
      %p56 = scmp.eq.s32.totalorder %s36, 0
      %p57 = por %p55, %p56
      %p58 = scmp.ne.s32.totalorder %s44, %s45
      %p59 = scmp.eq.s32.totalorder %s37, 1
      %p60 = por %p58, %p59
      %p62 = scmp.ne.s32.totalorder %s45, %s61
      %p63 = scmp.eq.s32.totalorder %s37, 0
      %p64 = por %p62, %p63
      %s65 = ssub.s32 %s31, %s38
      %p66 = scmp.eq.s32.totalorder %s65, 0
      %s68 = sadd.s32 %s67, 1
      %s69 = scalar_select %p66, %s67, %s68
      %p72 = pneg %p66
      %p73 = scmp.eq.s32.totalorder %s31, 1
      %p74 = por %p72, %p73
      %p75 = scmp.ne.s32.totalorder %s67, %s70
      %p76 = scmp.eq.s32.totalorder %s31, 0
      %p77 = por %p75, %p76
      %p78 = scmp.ne.s32.totalorder %s67, %s70
      %p79 = scmp.eq.s32.totalorder %s36, 1
      %p80 = por %p78, %p79
      %p81 = scmp.ne.s32.totalorder %s70, %s71
      %p82 = scmp.eq.s32.totalorder %s36, 0
      %p83 = por %p81, %p82
      %p84 = scmp.ne.s32.totalorder %s70, %s71
      %p85 = scmp.eq.s32.totalorder %s37, 1
      %p86 = por %p84, %p85
      %p88 = scmp.ne.s32.totalorder %s71, %s87
      %p89 = scmp.eq.s32.totalorder %s37, 0
      %p90 = por %p88, %p89
      %s92 = sadd.s32 %s91, 1
      %p95 = scmp.eq.s32.totalorder %s31, 1
      %p96 = scmp.ne.s32.totalorder %s91, %s93
      %p97 = scmp.eq.s32.totalorder %s31, 0
      %p98 = por %p96, %p97
      %p99 = scmp.ne.s32.totalorder %s91, %s93
      %p100 = scmp.eq.s32.totalorder %s36, 1
      %p101 = por %p99, %p100
      %p102 = scmp.ne.s32.totalorder %s93, %s94
      %p103 = scmp.eq.s32.totalorder %s36, 0
      %p104 = por %p102, %p103
      %p105 = scmp.ne.s32.totalorder %s93, %s94
      %p106 = scmp.eq.s32.totalorder %s37, 1
      %p107 = por %p105, %p106
      %p109 = scmp.ne.s32.totalorder %s94, %s108
      %p110 = scmp.eq.s32.totalorder %s37, 0
      %p111 = por %p109, %p110
      %s113 = sadd.s32 %s112, 1
      %p116 = scmp.eq.s32.totalorder %s31, 1
      %p117 = scmp.ne.s32.totalorder %s112, %s114
      %p118 = scmp.eq.s32.totalorder %s31, 0
      %p119 = por %p117, %p118
      %p120 = scmp.ne.s32.totalorder %s112, %s114
      %p121 = scmp.eq.s32.totalorder %s36, 1
      %p122 = por %p120, %p121
      %p123 = scmp.ne.s32.totalorder %s114, %s115
      %p124 = scmp.eq.s32.totalorder %s36, 0
      %p125 = por %p123, %p124
      %p126 = scmp.ne.s32.totalorder %s114, %s115
      %p127 = scmp.eq.s32.totalorder %s37, 1
      %p128 = por %p126, %p127
      %p130 = scmp.ne.s32.totalorder %s115, %s129
      %p131 = scmp.eq.s32.totalorder %s37, 0
      %p132 = por %p130, %p131
      %s134 = sadd.s32 %s133, 1
      %p137 = scmp.eq.s32.totalorder %s31, 1
      %p138 = scmp.ne.s32.totalorder %s133, %s135
      %p139 = scmp.eq.s32.totalorder %s31, 0
      %p140 = por %p138, %p139
      %p141 = scmp.ne.s32.totalorder %s133, %s135
      %p142 = scmp.eq.s32.totalorder %s36, 1
      %p143 = por %p141, %p142
      %p144 = scmp.ne.s32.totalorder %s135, %s136
      %p145 = scmp.eq.s32.totalorder %s36, 0
      %p146 = por %p144, %p145
      %p147 = scmp.ne.s32.totalorder %s135, %s136
      %p148 = scmp.eq.s32.totalorder %s37, 1
      %p149 = por %p147, %p148
      %p151 = scmp.ne.s32.totalorder %s136, %s150
      %p152 = scmp.eq.s32.totalorder %s37, 0
      %p153 = por %p151, %p152
      %s155 = sadd.s32 %s154, 1
      %p158 = scmp.eq.s32.totalorder %s31, 1
      %p159 = scmp.ne.s32.totalorder %s154, %s156
      %p160 = scmp.eq.s32.totalorder %s31, 0
      %p161 = por %p159, %p160
      %p162 = scmp.ne.s32.totalorder %s154, %s156
      %p163 = scmp.eq.s32.totalorder %s36, 1
      %p164 = por %p162, %p163
      %p165 = scmp.ne.s32.totalorder %s156, %s157
      %p166 = scmp.eq.s32.totalorder %s36, 0
      %p167 = por %p165, %p166
      %p168 = scmp.ne.s32.totalorder %s156, %s157
      %p169 = scmp.eq.s32.totalorder %s37, 1
      %p170 = por %p168, %p169
      %p172 = scmp.ne.s32.totalorder %s157, %s171
      %p173 = scmp.eq.s32.totalorder %s37, 0
      %p174 = por %p172, %p173
      %s176 = sadd.s32 %s175, 1
      %p179 = scmp.eq.s32.totalorder %s31, 1
      %p180 = scmp.ne.s32.totalorder %s175, %s177
      %p181 = scmp.eq.s32.totalorder %s31, 0
      %p182 = por %p180, %p181
      %p183 = scmp.ne.s32.totalorder %s175, %s177
      %p184 = scmp.eq.s32.totalorder %s36, 1
      %p185 = por %p183, %p184
      %p186 = scmp.ne.s32.totalorder %s177, %s178
      %p187 = scmp.eq.s32.totalorder %s36, 0
      %p188 = por %p186, %p187
      %p189 = scmp.ne.s32.totalorder %s177, %s178
      %p190 = scmp.eq.s32.totalorder %s37, 1
      %p191 = por %p189, %p190
      %p193 = scmp.ne.s32.totalorder %s178, %s192
      %p194 = scmp.eq.s32.totalorder %s37, 0
      %p195 = por %p193, %p194
      %s197 = sadd.s32 %s196, 1
      %p200 = scmp.eq.s32.totalorder %s31, 1
      %p201 = scmp.ne.s32.totalorder %s196, %s198
      %p202 = scmp.eq.s32.totalorder %s31, 0
      %p203 = por %p201, %p202
      %p204 = scmp.ne.s32.totalorder %s196, %s198
      %p205 = scmp.eq.s32.totalorder %s36, 1
      %p206 = por %p204, %p205
      %p207 = scmp.ne.s32.totalorder %s198, %s199
      %p208 = scmp.eq.s32.totalorder %s36, 0
      %p209 = por %p207, %p208
      %p210 = scmp.ne.s32.totalorder %s198, %s199
      %p211 = scmp.eq.s32.totalorder %s37, 1
      %p212 = por %p210, %p211
      %p214 = scmp.ne.s32.totalorder %s199, %s213
      %p215 = scmp.eq.s32.totalorder %s37, 0
      %p216 = por %p214, %p215
      %s218 = sadd.s32 %s217, 1
      %p221 = scmp.eq.s32.totalorder %s31, 1
      %p222 = scmp.ne.s32.totalorder %s217, %s219
      %p223 = scmp.eq.s32.totalorder %s31, 0
      %p224 = por %p222, %p223
      %p225 = scmp.ne.s32.totalorder %s217, %s219
      %p226 = scmp.eq.s32.totalorder %s36, 1
      %p227 = por %p225, %p226
      %p228 = scmp.ne.s32.totalorder %s219, %s220
      %p229 = scmp.eq.s32.totalorder %s36, 0
      %p230 = por %p228, %p229
      %p231 = scmp.ne.s32.totalorder %s219, %s220
      %p232 = scmp.eq.s32.totalorder %s37, 1
      %p233 = por %p231, %p232
      %p235 = scmp.ne.s32.totalorder %s220, %s234
      %p236 = scmp.eq.s32.totalorder %s37, 0
      %p237 = por %p235, %p236
      %s239 = sadd.s32 %s238, 1
      %p242 = scmp.eq.s32.totalorder %s31, 1
      %p243 = scmp.ne.s32.totalorder %s238, %s240
      %p244 = scmp.eq.s32.totalorder %s31, 0
      %p245 = por %p243, %p244
      %p246 = scmp.ne.s32.totalorder %s238, %s240
      %p247 = scmp.eq.s32.totalorder %s36, 1
      %p248 = por %p246, %p247
      %p249 = scmp.ne.s32.totalorder %s240, %s241
      %p250 = scmp.eq.s32.totalorder %s36, 0
      %p251 = por %p249, %p250
      %p252 = scmp.ne.s32.totalorder %s240, %s241
      %p253 = scmp.eq.s32.totalorder %s37, 1
      %p254 = por %p252, %p253
      %p256 = scmp.ne.s32.totalorder %s241, %s255
      %p257 = scmp.eq.s32.totalorder %s37, 0
      %p258 = por %p256, %p257
      %s260 = sadd.s32 %s259, 1
      %p263 = scmp.eq.s32.totalorder %s31, 1
      %p264 = scmp.ne.s32.totalorder %s259, %s261
      %p265 = scmp.eq.s32.totalorder %s31, 0
      %p266 = por %p264, %p265
      %p267 = scmp.ne.s32.totalorder %s259, %s261
      %p268 = scmp.eq.s32.totalorder %s36, 1
      %p269 = por %p267, %p268
      %p270 = scmp.ne.s32.totalorder %s261, %s262
      %p271 = scmp.eq.s32.totalorder %s36, 0
      %p272 = por %p270, %p271
      %p273 = scmp.ne.s32.totalorder %s261, %s262
      %p274 = scmp.eq.s32.totalorder %s37, 1
      %p275 = por %p273, %p274
      %p277 = scmp.ne.s32.totalorder %s262, %s276
      %p278 = scmp.eq.s32.totalorder %s37, 0
      %p279 = por %p277, %p278
      %s281 = sadd.s32 %s280, 1
      %p284 = scmp.eq.s32.totalorder %s31, 1
      %p285 = scmp.ne.s32.totalorder %s280, %s282
      %p286 = scmp.eq.s32.totalorder %s31, 0
      %p287 = por %p285, %p286
      %p288 = scmp.ne.s32.totalorder %s280, %s282
      %p289 = scmp.eq.s32.totalorder %s36, 1
      %p290 = por %p288, %p289
      %p291 = scmp.ne.s32.totalorder %s282, %s283
      %p292 = scmp.eq.s32.totalorder %s36, 0
      %p293 = por %p291, %p292
      %p294 = scmp.ne.s32.totalorder %s282, %s283
      %p295 = scmp.eq.s32.totalorder %s37, 1
      %p296 = por %p294, %p295
      %p298 = scmp.ne.s32.totalorder %s283, %s297
      %p299 = scmp.eq.s32.totalorder %s37, 0
      %p300 = por %p298, %p299
      %s302 = sadd.s32 %s301, 1
      %p305 = scmp.eq.s32.totalorder %s31, 1
      %p306 = scmp.ne.s32.totalorder %s301, %s303
      %p307 = scmp.eq.s32.totalorder %s31, 0
      %p308 = por %p306, %p307
      %p309 = scmp.ne.s32.totalorder %s301, %s303
      %p310 = scmp.eq.s32.totalorder %s36, 1
      %p311 = por %p309, %p310
      %p312 = scmp.ne.s32.totalorder %s303, %s304
      %p313 = scmp.eq.s32.totalorder %s36, 0
      %p314 = por %p312, %p313
      %p315 = scmp.ne.s32.totalorder %s303, %s304
      %p316 = scmp.eq.s32.totalorder %s37, 1
      %p317 = por %p315, %p316
      %p319 = scmp.ne.s32.totalorder %s304, %s318
      %p320 = scmp.eq.s32.totalorder %s37, 0
      %p321 = por %p319, %p320
      %s323 = sadd.s32 %s322, 1
      %p326 = scmp.eq.s32.totalorder %s31, 1
      %p327 = scmp.ne.s32.totalorder %s322, %s324
      %p328 = scmp.eq.s32.totalorder %s31, 0
      %p329 = por %p327, %p328
      %p330 = scmp.ne.s32.totalorder %s322, %s324
      %p331 = scmp.eq.s32.totalorder %s36, 1
      %p332 = por %p330, %p331
      %p333 = scmp.ne.s32.totalorder %s324, %s325
      %p334 = scmp.eq.s32.totalorder %s36, 0
      %p335 = por %p333, %p334
      %p336 = scmp.ne.s32.totalorder %s324, %s325
      %p337 = scmp.eq.s32.totalorder %s37, 1
      %p338 = por %p336, %p337
      %p340 = scmp.ne.s32.totalorder %s325, %s339
      %p341 = scmp.eq.s32.totalorder %s37, 0
      %p342 = por %p340, %p341
      %s344 = sadd.s32 %s343, 1
      %p347 = scmp.eq.s32.totalorder %s31, 1
      %p348 = scmp.ne.s32.totalorder %s343, %s345
      %p349 = scmp.eq.s32.totalorder %s31, 0
      %p350 = por %p348, %p349
      %p351 = scmp.ne.s32.totalorder %s343, %s345
      %p352 = scmp.eq.s32.totalorder %s36, 1
      %p353 = por %p351, %p352
      %p354 = scmp.ne.s32.totalorder %s345, %s346
      %p355 = scmp.eq.s32.totalorder %s36, 0
      %p356 = por %p354, %p355
      %p357 = scmp.ne.s32.totalorder %s345, %s346
      %p358 = scmp.eq.s32.totalorder %s37, 1
      %p359 = por %p357, %p358
      %p361 = scmp.ne.s32.totalorder %s346, %s360
      %p362 = scmp.eq.s32.totalorder %s37, 0
      %p363 = por %p361, %p362
      %s365 = sadd.s32 %s364, 1
      %p368 = scmp.eq.s32.totalorder %s31, 1
      %p369 = scmp.ne.s32.totalorder %s364, %s366
      %p370 = scmp.eq.s32.totalorder %s31, 0
      %p371 = por %p369, %p370
      %p372 = scmp.ne.s32.totalorder %s364, %s366
      %p373 = scmp.eq.s32.totalorder %s36, 1
      %p374 = por %p372, %p373
      %p375 = scmp.ne.s32.totalorder %s366, %s367
      %p376 = scmp.eq.s32.totalorder %s36, 0
      %p377 = por %p375, %p376
      %p378 = scmp.ne.s32.totalorder %s366, %s367
      %p379 = scmp.eq.s32.totalorder %s37, 1
      %p380 = por %p378, %p379
      %p382 = scmp.ne.s32.totalorder %s367, %s381
      %p383 = scmp.eq.s32.totalorder %s37, 0
      %p384 = por %p382, %p383
      %s386 = sadd.s32 %s385, 1
      %p389 = scmp.eq.s32.totalorder %s31, 1
      %p390 = scmp.ne.s32.totalorder %s385, %s387
      %p391 = scmp.eq.s32.totalorder %s31, 0
      %p392 = por %p390, %p391
      %p393 = scmp.ne.s32.totalorder %s385, %s387
      %p394 = scmp.eq.s32.totalorder %s36, 1
      %p395 = por %p393, %p394
      %p396 = scmp.ne.s32.totalorder %s387, %s388
      %p397 = scmp.eq.s32.totalorder %s36, 0
      %p398 = por %p396, %p397
      %p399 = scmp.ne.s32.totalorder %s387, %s388
      %p400 = scmp.eq.s32.totalorder %s37, 1
      %p401 = por %p399, %p400
      %p403 = scmp.ne.s32.totalorder %s388, %s402
      %p404 = scmp.eq.s32.totalorder %s37, 0
      %p405 = por %p403, %p404
      %s407 = sadd.s32 %s406, 1
      %p410 = scmp.eq.s32.totalorder %s31, 1
      %p411 = scmp.ne.s32.totalorder %s406, %s408
      %p412 = scmp.eq.s32.totalorder %s31, 0
      %p413 = por %p411, %p412
      %p414 = scmp.ne.s32.totalorder %s406, %s408
      %p415 = scmp.eq.s32.totalorder %s36, 1
      %p416 = por %p414, %p415
      %p417 = scmp.ne.s32.totalorder %s408, %s409
      %p418 = scmp.eq.s32.totalorder %s36, 0
      %p419 = por %p417, %p418
      %p420 = scmp.ne.s32.totalorder %s408, %s409
      %p421 = scmp.eq.s32.totalorder %s37, 1
      %p422 = por %p420, %p421
      %p424 = scmp.ne.s32.totalorder %s409, %s423
      %p425 = scmp.eq.s32.totalorder %s37, 0
      %p426 = por %p424, %p425
      %s427 = ssub.s32 %s31, %s38
      %p428 = scmp.eq.s32.totalorder %s427, 0
      %s430 = sadd.s32 %s429, 1
      %s431 = scalar_select %p428, %s429, %s430
      %p434 = pneg %p428
      %p435 = scmp.eq.s32.totalorder %s31, 1
      %p436 = por %p434, %p435
      %p437 = scmp.ne.s32.totalorder %s429, %s432
      %p438 = scmp.eq.s32.totalorder %s31, 0
      %p439 = por %p437, %p438
      %p440 = scmp.ne.s32.totalorder %s429, %s432
      %p441 = scmp.eq.s32.totalorder %s36, 1
      %p442 = por %p440, %p441
      %p443 = scmp.ne.s32.totalorder %s432, %s433
      %p444 = scmp.eq.s32.totalorder %s36, 0
      %p445 = por %p443, %p444
      %p446 = scmp.ne.s32.totalorder %s432, %s433
      %p447 = scmp.eq.s32.totalorder %s37, 1
      %p448 = por %p446, %p447
      %p450 = scmp.ne.s32.totalorder %s433, %s449
      %p451 = scmp.eq.s32.totalorder %s37, 0
      %p452 = por %p450, %p451
      %p453 = scmp.le.s32.totalorder 1, %s31
      %p454 = scmp.lt.s32.totalorder %s31, 3
      %p455 = pnand %p453, %p454
      %p456 = pneg %p455
      // Predicated region
      $region9: #{tpu_custom_call.1} parent=5 // pred_check
        _
      $region10: #{tpu_custom_call.1} parent=5 // pred_check_branch
        %458 = sbr.rel (%p455) target = $region12
      $region11: #{tpu_custom_call.1} parent=5 // pred_region
        %s459 = ssub.s32 %s31, 1
        // Predicated region
        $region13: #{tpu_custom_call.1} parent=11 // pred_check
          %p460 = pneg %p104
        $region14: #{tpu_custom_call.1} parent=11 // pred_check_branch
          %462 = sbr.rel (%p460) target = $region16
        $region15: #{tpu_custom_call.1} parent=11 // pred_region
          %464 = vsyncadd [#allocation6], 0
          %s466 = sshll.u32 %s2, 4
          %s467 = int_to_ptr.hbm [resolvable:$true] %s466
          %s468 = sshll.u32 [#allocation5], 4
          %s469 = int_to_ptr.vmem [resolvable:$true] %s468
          %471 = dma.hbm_to_vmem [thread:$0]  %s467, 16, %s469, [#allocation6]
        $region16: #{tpu_custom_call.1} parent=11 // pred_fallthru
          _
        // Predicated region
        $region17: #{tpu_custom_call.1} parent=11 // pred_check
          %p472 = pneg %p125
        $region18: #{tpu_custom_call.1} parent=11 // pred_check_branch
          %474 = sbr.rel (%p472) target = $region20
        $region19: #{tpu_custom_call.1} parent=11 // pred_region
          %476 = vsyncadd [#allocation6], 0
          %s478 = sshll.u32 %s3, 4
          %s479 = int_to_ptr.hbm [resolvable:$true] %s478
          %s480 = sshll.u32 [#allocation7], 4
          %s481 = int_to_ptr.vmem [resolvable:$true] %s480
          %483 = dma.hbm_to_vmem [thread:$0]  %s479, 16, %s481, [#allocation6]
        $region20: #{tpu_custom_call.1} parent=11 // pred_fallthru
          _
        // Predicated region
        $region21: #{tpu_custom_call.1} parent=11 // pred_check
          %p484 = pneg %p146
        $region22: #{tpu_custom_call.1} parent=11 // pred_check_branch
          %486 = sbr.rel (%p484) target = $region24
        $region23: #{tpu_custom_call.1} parent=11 // pred_region
          _
        $region24: #{tpu_custom_call.1} parent=11 // pred_fallthru
          _
        // Predicated region
        $region25: #{tpu_custom_call.1} parent=11 // pred_check
          %p487 = pneg %p167
        $region26: #{tpu_custom_call.1} parent=11 // pred_check_branch
          %489 = sbr.rel (%p487) target = $region28
        $region27: #{tpu_custom_call.1} parent=11 // pred_region
          _
        $region28: #{tpu_custom_call.1} parent=11 // pred_fallthru
          _
        // Predicated region
        $region29: #{tpu_custom_call.1} parent=11 // pred_check
          %p490 = pneg %p188
        $region30: #{tpu_custom_call.1} parent=11 // pred_check_branch
          %492 = sbr.rel (%p490) target = $region32
        $region31: #{tpu_custom_call.1} parent=11 // pred_region
          _
        $region32: #{tpu_custom_call.1} parent=11 // pred_fallthru
          _
        // Predicated region
        $region33: #{tpu_custom_call.1} parent=11 // pred_check
          %p493 = pneg %p209
        $region34: #{tpu_custom_call.1} parent=11 // pred_check_branch
          %495 = sbr.rel (%p493) target = $region36
        $region35: #{tpu_custom_call.1} parent=11 // pred_region
          _
        $region36: #{tpu_custom_call.1} parent=11 // pred_fallthru
          _
        // Predicated region
        $region37: #{tpu_custom_call.1} parent=11 // pred_check
          %p496 = pneg %p230
        $region38: #{tpu_custom_call.1} parent=11 // pred_check_branch
          %498 = sbr.rel (%p496) target = $region40
        $region39: #{tpu_custom_call.1} parent=11 // pred_region
          _
        $region40: #{tpu_custom_call.1} parent=11 // pred_fallthru
          _
        // Predicated region
        $region41: #{tpu_custom_call.1} parent=11 // pred_check
          %p499 = pneg %p251
        $region42: #{tpu_custom_call.1} parent=11 // pred_check_branch
          %501 = sbr.rel (%p499) target = $region44
        $region43: #{tpu_custom_call.1} parent=11 // pred_region
          %503 = vsyncadd [#allocation9], 0
          %s504 = sshll.u32 %s9, 4
          %s505 = int_to_ptr.hbm [resolvable:$true] %s504
          %s506 = sshll.u32 [#allocation8], 4
          %s507 = int_to_ptr.vmem [resolvable:$true] %s506
          %512 = dma.hbm_to_vmem [thread:$0]  %s505, 32, %s507, [#allocation9], 16, 16, 1
        $region44: #{tpu_custom_call.1} parent=11 // pred_fallthru
          _
        // Predicated region
        $region45: #{tpu_custom_call.1} parent=11 // pred_check
          %p513 = pneg %p272
        $region46: #{tpu_custom_call.1} parent=11 // pred_check_branch
          %515 = sbr.rel (%p513) target = $region48
        $region47: #{tpu_custom_call.1} parent=11 // pred_region
          _
        $region48: #{tpu_custom_call.1} parent=11 // pred_fallthru
          _
        // Predicated region
        $region49: #{tpu_custom_call.1} parent=11 // pred_check
          %p516 = pneg %p293
        $region50: #{tpu_custom_call.1} parent=11 // pred_check_branch
          %518 = sbr.rel (%p516) target = $region52
        $region51: #{tpu_custom_call.1} parent=11 // pred_region
          _
        $region52: #{tpu_custom_call.1} parent=11 // pred_fallthru
          _
        // Predicated region
        $region53: #{tpu_custom_call.1} parent=11 // pred_check
          %p519 = pneg %p314
        $region54: #{tpu_custom_call.1} parent=11 // pred_check_branch
          %521 = sbr.rel (%p519) target = $region56
        $region55: #{tpu_custom_call.1} parent=11 // pred_region
          _
        $region56: #{tpu_custom_call.1} parent=11 // pred_fallthru
          _
        // Predicated region
        $region57: #{tpu_custom_call.1} parent=11 // pred_check
          %p522 = pneg %p335
        $region58: #{tpu_custom_call.1} parent=11 // pred_check_branch
          %524 = sbr.rel (%p522) target = $region60
        $region59: #{tpu_custom_call.1} parent=11 // pred_region
          _
        $region60: #{tpu_custom_call.1} parent=11 // pred_fallthru
          _
        // Predicated region
        $region61: #{tpu_custom_call.1} parent=11 // pred_check
          %p525 = pneg %p356
        $region62: #{tpu_custom_call.1} parent=11 // pred_check_branch
          %527 = sbr.rel (%p525) target = $region64
        $region63: #{tpu_custom_call.1} parent=11 // pred_region
          _
        $region64: #{tpu_custom_call.1} parent=11 // pred_fallthru
          _
        // Predicated region
        $region65: #{tpu_custom_call.1} parent=11 // pred_check
          %p528 = pneg %p377
        $region66: #{tpu_custom_call.1} parent=11 // pred_check_branch
          %530 = sbr.rel (%p528) target = $region68
        $region67: #{tpu_custom_call.1} parent=11 // pred_region
          %532 = vsyncadd [#allocation9], 0
          %s533 = sshll.u32 %s15, 4
          %s534 = int_to_ptr.hbm [resolvable:$true] %s533
          %s535 = sshll.u32 [#allocation10], 4
          %s536 = int_to_ptr.vmem [resolvable:$true] %s535
          %541 = dma.hbm_to_vmem [thread:$0]  %s534, 32, %s536, [#allocation9], 16, 16, 1
        $region68: #{tpu_custom_call.1} parent=11 // pred_fallthru
          _
        // Predicated region
        $region69: #{tpu_custom_call.1} parent=11 // pred_check
          %p542 = pneg %p398
        $region70: #{tpu_custom_call.1} parent=11 // pred_check_branch
          %544 = sbr.rel (%p542) target = $region72
        $region71: #{tpu_custom_call.1} parent=11 // pred_region
          _
        $region72: #{tpu_custom_call.1} parent=11 // pred_fallthru
          _
        // Predicated region
        $region73: #{tpu_custom_call.1} parent=11 // pred_check
          %p545 = pneg %p419
        $region74: #{tpu_custom_call.1} parent=11 // pred_check_branch
          %547 = sbr.rel (%p545) target = $region76
        $region75: #{tpu_custom_call.1} parent=11 // pred_region
          _
        $region76: #{tpu_custom_call.1} parent=11 // pred_fallthru
          _
      $region12: #{tpu_custom_call.1} parent=5 // pred_fallthru
        _
      %p548 = scmp.lt.s32.totalorder %s31, 2
      // Predicated region
      $region77: #{tpu_custom_call.1} parent=5 // pred_check
        %p549 = pneg %p548
      $region78: #{tpu_custom_call.1} parent=5 // pred_check_branch
        %551 = sbr.rel (%p549) target = $region80
      $region79: #{tpu_custom_call.1} parent=5 // pred_region
        // Predicated region
        $region81: #{tpu_custom_call.1} parent=79 // pred_check
          %p552 = pneg %p51
        $region82: #{tpu_custom_call.1} parent=79 // pred_check_branch
          %554 = sbr.rel (%p552) target = $region84
        $region83: #{tpu_custom_call.1} parent=79 // pred_region
          %s555 = sand.u32 %s41, 1
          %s556 = scalar_lea.sflag [#allocation4], %s555
          %s557 = sand.u32 %s41, 1
          %s558 = smul.addr %s557, 8
          %s559 = scalar_lea.vmem [#allocation3], %s558
          %561 = vsyncadd %s556, 0
          %s562 = smul.addr %s31, 8
          %s563 = scalar_lea.hbm %s0, %s562
          %s565 = sshll.u32 %s563, 4
          %s566 = int_to_ptr.hbm [resolvable:$true] %s565
          %s567 = sshll.u32 %s559, 4
          %s568 = int_to_ptr.vmem [resolvable:$true] %s567
          %570 = dma.hbm_to_vmem [thread:$0]  %s566, 128, %s568, %s556
        $region84: #{tpu_custom_call.1} parent=79 // pred_fallthru
          _
        // Predicated region
        $region85: #{tpu_custom_call.1} parent=79 // pred_check
          %p571 = pneg %p77
        $region86: #{tpu_custom_call.1} parent=79 // pred_check_branch
          %573 = sbr.rel (%p571) target = $region88
        $region87: #{tpu_custom_call.1} parent=79 // pred_region
          %p574 = scmp.lt.s32.totalorder %s31, 1
          %s575 = scalar_select %p574, %s31, 1
          %s576 = scalar_lea.vmem %s1, %s575
        $region88: #{tpu_custom_call.1} parent=79 // pred_fallthru
          _
      $region80: #{tpu_custom_call.1} parent=5 // pred_fallthru
        _
      %p577 = scmp.le.s32.totalorder 1, %s31
      %p578 = scmp.lt.s32.totalorder %s31, 3
      %p579 = pnand %p577, %p578
      %p580 = pneg %p579
      // Predicated region
      $region89: #{tpu_custom_call.1} parent=5 // pred_check
        _
      $region90: #{tpu_custom_call.1} parent=5 // pred_check_branch
        %582 = sbr.rel (%p579) target = $region92
      $region91: #{tpu_custom_call.1} parent=5 // pred_region
        %s583 = ssub.s32 %s31, 1
        %s584 = sand.u32 %s44, 1
        %s585 = scalar_lea.sflag [#allocation4], %s584
        %s586 = sand.u32 %s44, 1
        %s587 = smul.addr %s586, 8
        %s588 = scalar_lea.vmem [#allocation3], %s587
        // Predicated region
        $region93: #{tpu_custom_call.1} parent=91 // pred_check
          %p589 = pneg %p57
        $region94: #{tpu_custom_call.1} parent=91 // pred_check_branch
          %591 = sbr.rel (%p589) target = $region96
        $region95: #{tpu_custom_call.1} parent=91 // pred_region
          %593 = dma.done %s585, 128
        $region96: #{tpu_custom_call.1} parent=91 // pred_fallthru
          _
        // Predicated region
        $region97: #{tpu_custom_call.1} parent=91 // pred_check
          %p594 = pneg %p104
        $region98: #{tpu_custom_call.1} parent=91 // pred_check_branch
          %596 = sbr.rel (%p594) target = $region100
        $region99: #{tpu_custom_call.1} parent=91 // pred_region
          %598 = dma.done [#allocation6], 16
        $region100: #{tpu_custom_call.1} parent=91 // pred_fallthru
          _
        // Predicated region
        $region101: #{tpu_custom_call.1} parent=91 // pred_check
          %p599 = pneg %p125
        $region102: #{tpu_custom_call.1} parent=91 // pred_check_branch
          %601 = sbr.rel (%p599) target = $region104
        $region103: #{tpu_custom_call.1} parent=91 // pred_region
          %603 = dma.done [#allocation6], 16
        $region104: #{tpu_custom_call.1} parent=91 // pred_fallthru
          _
        // Predicated region
        $region105: #{tpu_custom_call.1} parent=91 // pred_check
          %p604 = pneg %p251
        $region106: #{tpu_custom_call.1} parent=91 // pred_check_branch
          %606 = sbr.rel (%p604) target = $region108
        $region107: #{tpu_custom_call.1} parent=91 // pred_region
          %608 = dma.done [#allocation9], 32
        $region108: #{tpu_custom_call.1} parent=91 // pred_fallthru
          _
        // Predicated region
        $region109: #{tpu_custom_call.1} parent=91 // pred_check
          %p609 = pneg %p377
        $region110: #{tpu_custom_call.1} parent=91 // pred_check_branch
          %611 = sbr.rel (%p609) target = $region112
        $region111: #{tpu_custom_call.1} parent=91 // pred_region
          %613 = dma.done [#allocation9], 32
        $region112: #{tpu_custom_call.1} parent=91 // pred_fallthru
          _
        %s614 = sand.u32 %s44, 1
        %s615 = scalar_lea.sflag [#allocation4], %s614
        %s616 = sand.u32 %s44, 1
        %s617 = smul.addr %s616, 8
        %s618 = scalar_lea.vmem [#allocation3], %s617
        %p619 = pneg %p57
        %p620 = pneg %p54
        %p621 = scmp.lt.s32.totalorder %s36, 1
        %s622 = scalar_select %p621, %s36, 1
        %s623 = scalar_lea.vmem %s1, %s622
        %p624 = pneg %p83
        %p625 = pneg %p80
        %p626 = pneg %p104
        %p627 = pneg %p101
        %p628 = pneg %p125
        %p629 = pneg %p122
        %p630 = pneg %p146
        %p631 = pneg %p143
        %p632 = pneg %p167
        %p633 = pneg %p164
        %p634 = pneg %p188
        %p635 = pneg %p185
        %p636 = pneg %p209
        %p637 = pneg %p206
        %p638 = pneg %p230
        %p639 = pneg %p227
        %p640 = pneg %p251
        %p641 = pneg %p248
        %p642 = pneg %p272
        %p643 = pneg %p269
        %p644 = pneg %p293
        %p645 = pneg %p290
        %p646 = pneg %p314
        %p647 = pneg %p311
        %p648 = pneg %p335
        %p649 = pneg %p332
        %p650 = pneg %p356
        %p651 = pneg %p353
        %p652 = pneg %p377
        %p653 = pneg %p374
        %p654 = pneg %p398
        %p655 = pneg %p395
        %p656 = pneg %p419
        %p657 = pneg %p416
        %p658 = pneg %p445
        %p659 = pneg %p442
        %p660 = scmp.lt.s32.totalorder %s36, 1
        %s661 = scalar_select %p660, %s36, 1
        %s662 = scalar_lea.vmem %s18, %s661
        %p663 = scmp.lt.s32.totalorder %s36, 1
        %s664 = scalar_select %p663, %s36, 1
        %s665 = scalar_lea.vmem %s1, %s664
        %p666 = scmp.lt.s32.totalorder %s36, 1
        %s667 = scalar_select %p666, %s36, 1
        %s668 = scalar_lea.vmem %s18, %s667
        %v669 = vld [vmem:[%s588] sm:$0xff]
        %v670 = vld [vmem:[#allocation5] sm:$0x1]
        %v671 = vld [vmem:[#allocation7] sm:$0x1]
        %vm672 = vcmask 261120
        %v673 = vsel %vm672, %v669, 0.0
        %674 = vadd.xlane.f32.xlu0 %v673
        %v675 = vpop.xlane.xlu0 %674
        %v676 = vrcp.pop 32.0
        %v677 = vmul.f32 32.0, %v676
        %v678 = vsub.f32 1.0, %v677
        %v679 = vmul.f32 %v676, %v678
        %v680 = vadd.f32 %v676, %v679
        %vm681 = vweird.f32 %v676
        %v682 = vsel %vm681, %v676, %v680
        %v683 = vmul.f32 %v675, %v682
        %v684 = vsub.f32 %v669, %v683
        %v685 = vmul.f32 %v684, %v684
        %v686 = vsel %vm672, %v685, 0.0
        %687 = vadd.xlane.f32.xlu0 %v686
        %v688 = vpop.xlane.xlu0 %687
        %v689 = vmul.f32 %v688, %v682
        %v690 = vadd.f32 %v689, 1e-12
        %v691 = vrsqrt.pop %v690
        %v692 = vmul.f32 %v691, %v690
        %v693 = vmul.f32 %v692, %v691
        %v694 = vmul.f32 0.5, %v693
        %v695 = vsub.f32 1.5, %v694
        %v696 = vmul.f32 %v691, %v695
        %vm697 = vweird.f32 %v690
        %vm698 = vweird.f32 %v691
        %vm699 = vmor %vm697, %vm698
        %v700 = vsel %vm699, %v691, %v696
        %v701 = vmul.f32 %v684, %v700
        %v703 = vperm.slane %v670, 0
        %v705 = vmul.f32 %v701, %v703
        %v707 = vperm.slane %v671, 0
        %v709 = vadd.f32 %v705, %v707
        %v710 = vld [vmem:[%s665] sm:$0x1]
        %v711 = vsub.f32 %v710, 1.0
        %v712 = vmul.f32 %v711, 1e+09
        %v713 = vld [vmem:[%s4] sm:$0xff]
        %v714 = vld [vmem:[%s4 + $0x8] sm:$0xff]
        %v715 = vld [vmem:[%s4 + $0x10] sm:$0xff]
        %v716 = vld [vmem:[%s4 + $0x18] sm:$0xff]
        %v717 = vld [vmem:[%s5] sm:$0x1]
        %v719 = vperm.slane %v717, 0
        %v722 = vsel %vm672, %v709, 0
        %724 = vmatpush.msra.mxu0 0.0
        %725 = vmatpush.msra.mxu0 0.0
        %726 = vmatpush.msra.mxu0 0.0
        %727 = vmatpush.msra.mxu0 0.0
        %728 = vmatpush.msra.mxu0 0.0
        %729 = vmatpush.msra.mxu0 0.0
        %730 = vmatpush.msra.mxu0 0.0
        %731 = vmatpush.msra.mxu0 0.0
        %732 = vmatpush.msra.mxu0 0.0
        %733 = vmatpush.msra.mxu0 0.0
        %734 = vmatpush.msra.mxu0 0.0
        %735 = vmatpush.msra.mxu0 0.0
        %736 = vmatpush.msra.mxu0 %v716
        %737 = vmatpush.msra.mxu0 %v715
        %738 = vmatpush.msra.mxu0 %v714
        %739 = vmatpush.msra.mxu0 %v713
        %740 = vmatmul.f32.gmra.mxu0 %v722
        %v741 = vpop.f32.mrf.mxu0
        %v742 = vadd.f32 %v719, %v741
        %743 = vdwg.mxu0
        %745 = vrot.lane.b32.xlu0 %v742, 96
        %v746 = vpop.permute.xlu0 %745
        %vm747 = vcmask 130048
        %v748 = vsel %vm747, %v742, 0
        %v750 = vsel %vm747, %v746, 0
        %752 = vmatpush.xpose.msra.mxu0 0.0
        %753 = vmatpush.xpose.msra.mxu0 0.0
        %754 = vmatpush.xpose.msra.mxu0 0.0
        %755 = vmatpush.xpose.msra.mxu0 0.0
        %756 = vmatpush.xpose.msra.mxu0 0.0
        %757 = vmatpush.xpose.msra.mxu0 0.0
        %758 = vmatpush.xpose.msra.mxu0 0.0
        %759 = vmatpush.xpose.msra.mxu0 0.0
        %760 = vmatpush.xpose.msra.mxu0 0.0
        %761 = vmatpush.xpose.msra.mxu0 0.0
        %762 = vmatpush.xpose.msra.mxu0 0.0
        %763 = vmatpush.xpose.msra.mxu0 0.0
        %764 = vmatpush.xpose.msra.mxu0 0.0
        %765 = vmatpush.xpose.msra.mxu0 0.0
        %766 = vmatpush.xpose.msra.mxu0 0.0
        %767 = vmatpush.xpose.msra.mxu0 %v750
        %768 = vmatmul.f32.gmra.mxu0 %v748
        %v769 = vpop.f32.mrf.mxu0
        %v770 = vadd.f32 0.0, %v769
        %771 = vdwg.mxu0
        %v772 = vmul.f32 %v770, 0.25
        %v774 = vperm.slane %v712, 0
        %v776 = vadd.f32 %v772, %v774
        %vm777 = vcmask 64512
        %v778 = vsel %vm777, %v776, -inf
        %779 = vmax.xlane.f32.xlu0 %v778
        %v780 = vpop.xlane.xlu0 %779
        %v781 = vsub.f32 %v776, %v780
        %v782 = vmul.f32 %v781, 1.442695
        %v783 = vpow.pop %v782
        %v784 = vsel %vm777, %v783, 0.0
        %785 = vadd.xlane.f32.xlu0 %v784
        %v786 = vpop.xlane.xlu0 %785
        %v787 = vrcp.pop %v786
        %v788 = vmul.f32 %v783, %v787
        %789 = vrot.lane.b32.xlu0 %v742, 64
        %v790 = vpop.permute.xlu0 %789
        %v793 = vsel %vm777, %v788, 0
        %795 = vmatpush.msra.mxu0 0.0
        %796 = vmatpush.msra.mxu0 0.0
        %797 = vmatpush.msra.mxu0 0.0
        %798 = vmatpush.msra.mxu0 0.0
        %799 = vmatpush.msra.mxu0 0.0
        %800 = vmatpush.msra.mxu0 0.0
        %801 = vmatpush.msra.mxu0 0.0
        %802 = vmatpush.msra.mxu0 0.0
        %803 = vmatpush.msra.mxu0 0.0
        %804 = vmatpush.msra.mxu0 0.0
        %805 = vmatpush.msra.mxu0 0.0
        %806 = vmatpush.msra.mxu0 0.0
        %807 = vmatpush.msra.mxu0 0.0
        %808 = vmatpush.msra.mxu0 0.0
        %809 = vmatpush.msra.mxu0 0.0
        %810 = vmatpush.msra.mxu0 %v790
        %811 = vmatmul.f32.gmra.mxu0 %v793
        %v812 = vpop.f32.mrf.mxu0
        %v813 = vadd.f32 0.0, %v812
        %814 = vdwg.mxu0
        %815 = vrot.lane.b32.xlu0 %v742, 112
        %v816 = vpop.permute.xlu0 %815
        %817 = vrot.lane.b32.xlu0 %v742, 80
        %v818 = vpop.permute.xlu0 %817
        %v819 = vsel %vm747, %v816, 0
        %v821 = vsel %vm747, %v818, 0
        %823 = vmatpush.xpose.msra.mxu0 0.0
        %824 = vmatpush.xpose.msra.mxu0 0.0
        %825 = vmatpush.xpose.msra.mxu0 0.0
        %826 = vmatpush.xpose.msra.mxu0 0.0
        %827 = vmatpush.xpose.msra.mxu0 0.0
        %828 = vmatpush.xpose.msra.mxu0 0.0
        %829 = vmatpush.xpose.msra.mxu0 0.0
        %830 = vmatpush.xpose.msra.mxu0 0.0
        %831 = vmatpush.xpose.msra.mxu0 0.0
        %832 = vmatpush.xpose.msra.mxu0 0.0
        %833 = vmatpush.xpose.msra.mxu0 0.0
        %834 = vmatpush.xpose.msra.mxu0 0.0
        %835 = vmatpush.xpose.msra.mxu0 0.0
        %836 = vmatpush.xpose.msra.mxu0 0.0
        %837 = vmatpush.xpose.msra.mxu0 0.0
        %838 = vmatpush.xpose.msra.mxu0 %v821
        %839 = vmatmul.f32.gmra.mxu0 %v819
        %v840 = vpop.f32.mrf.mxu0
        %v841 = vadd.f32 0.0, %v840
        %842 = vdwg.mxu0
        %v843 = vmul.f32 %v841, 0.25
        %v844 = vadd.f32 %v843, %v774
        %v845 = vsel %vm777, %v844, -inf
        %846 = vmax.xlane.f32.xlu0 %v845
        %v847 = vpop.xlane.xlu0 %846
        %v848 = vsub.f32 %v844, %v847
        %v849 = vmul.f32 %v848, 1.442695
        %v850 = vpow.pop %v849
        %v851 = vsel %vm777, %v850, 0.0
        %852 = vadd.xlane.f32.xlu0 %v851
        %v853 = vpop.xlane.xlu0 %852
        %v854 = vrcp.pop %v853
        %v855 = vmul.f32 %v850, %v854
        %856 = vrot.lane.b32.xlu0 %v742, 48
        %v857 = vpop.permute.xlu0 %856
        %v860 = vsel %vm777, %v855, 0
        %862 = vmatpush.msra.mxu0 0.0
        %863 = vmatpush.msra.mxu0 0.0
        %864 = vmatpush.msra.mxu0 0.0
        %865 = vmatpush.msra.mxu0 0.0
        %866 = vmatpush.msra.mxu0 0.0
        %867 = vmatpush.msra.mxu0 0.0
        %868 = vmatpush.msra.mxu0 0.0
        %869 = vmatpush.msra.mxu0 0.0
        %870 = vmatpush.msra.mxu0 0.0
        %871 = vmatpush.msra.mxu0 0.0
        %872 = vmatpush.msra.mxu0 0.0
        %873 = vmatpush.msra.mxu0 0.0
        %874 = vmatpush.msra.mxu0 0.0
        %875 = vmatpush.msra.mxu0 0.0
        %876 = vmatpush.msra.mxu0 0.0
        %877 = vmatpush.msra.mxu0 %v857
        %878 = vmatmul.f32.gmra.mxu0 %v860
        %v879 = vpop.f32.mrf.mxu0
        %v880 = vadd.f32 0.0, %v879
        %881 = vdwg.mxu0
        %883 = vrot.lane.b32.xlu0 %v880, 16
        %v884 = vpop.permute.xlu0 %883
        %v886 = vsel %vm747, %v813, %v884
        %v887 = vld [vmem:[%s6] sm:$0xff]
        %v888 = vld [vmem:[%s6 + $0x8] sm:$0xff]
        %v889 = vld [vmem:[%s6 + $0x10] sm:$0xff]
        %v890 = vld [vmem:[%s6 + $0x18] sm:$0xff]
        %v891 = vld [vmem:[%s7] sm:$0x1]
        %v893 = vperm.slane %v891, 0
        %v896 = vsel %vm672, %v886, 0
        %898 = vmatpush.msra.mxu0 0.0
        %899 = vmatpush.msra.mxu0 0.0
        %900 = vmatpush.msra.mxu0 0.0
        %901 = vmatpush.msra.mxu0 0.0
        %902 = vmatpush.msra.mxu0 0.0
        %903 = vmatpush.msra.mxu0 0.0
        %904 = vmatpush.msra.mxu0 0.0
        %905 = vmatpush.msra.mxu0 0.0
        %906 = vmatpush.msra.mxu0 0.0
        %907 = vmatpush.msra.mxu0 0.0
        %908 = vmatpush.msra.mxu0 0.0
        %909 = vmatpush.msra.mxu0 0.0
        %910 = vmatpush.msra.mxu0 %v890
        %911 = vmatpush.msra.mxu0 %v889
        %912 = vmatpush.msra.mxu0 %v888
        %913 = vmatpush.msra.mxu0 %v887
        %914 = vmatmul.f32.gmra.mxu0 %v896
        %v915 = vpop.f32.mrf.mxu0
        %v916 = vadd.f32 %v893, %v915
        %917 = vdwg.mxu0
        %v918 = vadd.f32 %v916, %v709
        %v919 = vld [vmem:[%s8] sm:$0x1]
        %v920 = vld [vmem:[#allocation8] sm:$0x1]
        %v921 = vsel %vm672, %v918, 0.0
        %922 = vadd.xlane.f32.xlu0 %v921
        %v923 = vpop.xlane.xlu0 %922
        %v924 = vmul.f32 %v923, %v682
        %v925 = vsub.f32 %v918, %v924
        %v926 = vmul.f32 %v925, %v925
        %v927 = vsel %vm672, %v926, 0.0
        %928 = vadd.xlane.f32.xlu0 %v927
        %v929 = vpop.xlane.xlu0 %928
        %v930 = vmul.f32 %v929, %v682
        %v931 = vadd.f32 %v930, 1e-12
        %v932 = vrsqrt.pop %v931
        %v933 = vmul.f32 %v932, %v931
        %v934 = vmul.f32 %v933, %v932
        %v935 = vmul.f32 0.5, %v934
        %v936 = vsub.f32 1.5, %v935
        %v937 = vmul.f32 %v932, %v936
        %vm938 = vweird.f32 %v931
        %vm939 = vweird.f32 %v932
        %vm940 = vmor %vm938, %vm939
        %v941 = vsel %vm940, %v932, %v937
        %v942 = vmul.f32 %v925, %v941
        %v944 = vperm.slane %v919, 0
        %v946 = vmul.f32 %v942, %v944
        %v948 = vperm.slane %v920, 0
        %v950 = vadd.f32 %v946, %v948
        %v951 = vld [vmem:[%s10] sm:$0xff]
        %v952 = vld [vmem:[%s10 + $0x8] sm:$0xff]
        %v953 = vld [vmem:[%s10 + $0x10] sm:$0xff]
        %v954 = vld [vmem:[%s10 + $0x18] sm:$0xff]
        %v955 = vld [vmem:[%s11] sm:$0x1]
        %v957 = vperm.slane %v955, 0
        %v960 = vsel %vm672, %v950, 0
        %962 = vmatpush.msra.mxu0 0.0
        %963 = vmatpush.msra.mxu0 0.0
        %964 = vmatpush.msra.mxu0 0.0
        %965 = vmatpush.msra.mxu0 0.0
        %966 = vmatpush.msra.mxu0 0.0
        %967 = vmatpush.msra.mxu0 0.0
        %968 = vmatpush.msra.mxu0 0.0
        %969 = vmatpush.msra.mxu0 0.0
        %970 = vmatpush.msra.mxu0 0.0
        %971 = vmatpush.msra.mxu0 0.0
        %972 = vmatpush.msra.mxu0 0.0
        %973 = vmatpush.msra.mxu0 0.0
        %974 = vmatpush.msra.mxu0 %v954
        %975 = vmatpush.msra.mxu0 %v953
        %976 = vmatpush.msra.mxu0 %v952
        %977 = vmatpush.msra.mxu0 %v951
        %978 = vmatmul.f32.gmra.mxu0 %v960
        %v979 = vpop.f32.mrf.mxu0
        %v980 = vadd.f32 %v957, %v979
        %981 = vdwg.mxu0
        %v982 = vmul.f32 %v980, 0.5
        %v983 = vmul.f32 %v980, 0.044715
        %v984 = vmul.f32 %v983, %v980
        %v985 = vmul.f32 %v984, %v980
        %v986 = vadd.f32 %v980, %v985
        %v987 = vmul.f32 %v986, 0.7978846
        %v988 = vtanh.pop %v987
        %v989 = vadd.f32 %v988, 1.0
        %v990 = vmul.f32 %v982, %v989
        %v991 = vld [vmem:[%s12] sm:$0xff]
        %v992 = vld [vmem:[%s12 + $0x8] sm:$0xff]
        %v993 = vld [vmem:[%s12 + $0x10] sm:$0xff]
        %v994 = vld [vmem:[%s12 + $0x18] sm:$0xff]
        %v995 = vld [vmem:[%s12 + $0x20] sm:$0xff]
        %v996 = vld [vmem:[%s12 + $0x28] sm:$0xff]
        %v997 = vld [vmem:[%s12 + $0x30] sm:$0xff]
        %v998 = vld [vmem:[%s12 + $0x38] sm:$0xff]
        %v999 = vld [vmem:[%s13] sm:$0x1]
        %v1001 = vperm.slane %v999, 0
        %vm1003 = vcmask 523264
        %v1005 = vsel %vm1003, %v990, 0
        %1007 = vmatpush.msra.mxu0 0.0
        %1008 = vmatpush.msra.mxu0 0.0
        %1009 = vmatpush.msra.mxu0 0.0
        %1010 = vmatpush.msra.mxu0 0.0
        %1011 = vmatpush.msra.mxu0 0.0
        %1012 = vmatpush.msra.mxu0 0.0
        %1013 = vmatpush.msra.mxu0 0.0
        %1014 = vmatpush.msra.mxu0 0.0
        %1015 = vmatpush.msra.mxu0 %v998
        %1016 = vmatpush.msra.mxu0 %v997
        %1017 = vmatpush.msra.mxu0 %v996
        %1018 = vmatpush.msra.mxu0 %v995
        %1019 = vmatpush.msra.mxu0 %v994
        %1020 = vmatpush.msra.mxu0 %v993
        %1021 = vmatpush.msra.mxu0 %v992
        %1022 = vmatpush.msra.mxu0 %v991
        %1023 = vmatmul.f32.gmra.mxu0 %v1005
        %v1024 = vpop.f32.mrf.mxu0
        %v1025 = vadd.f32 %v1001, %v1024
        %1026 = vdwg.mxu0
        %v1027 = vadd.f32 %v1025, %v950
        %v1028 = vld [vmem:[%s14] sm:$0x1]
        %v1029 = vld [vmem:[#allocation10] sm:$0x1]
        %v1030 = vsel %vm672, %v1027, 0.0
        %1031 = vadd.xlane.f32.xlu0 %v1030
        %v1032 = vpop.xlane.xlu0 %1031
        %v1033 = vmul.f32 %v1032, %v682
        %v1034 = vsub.f32 %v1027, %v1033
        %v1035 = vmul.f32 %v1034, %v1034
        %v1036 = vsel %vm672, %v1035, 0.0
        %1037 = vadd.xlane.f32.xlu0 %v1036
        %v1038 = vpop.xlane.xlu0 %1037
        %v1039 = vmul.f32 %v1038, %v682
        %v1040 = vadd.f32 %v1039, 1e-12
        %v1041 = vrsqrt.pop %v1040
        %v1042 = vmul.f32 %v1041, %v1040
        %v1043 = vmul.f32 %v1042, %v1041
        %v1044 = vmul.f32 0.5, %v1043
        %v1045 = vsub.f32 1.5, %v1044
        %v1046 = vmul.f32 %v1041, %v1045
        %vm1047 = vweird.f32 %v1040
        %vm1048 = vweird.f32 %v1041
        %vm1049 = vmor %vm1047, %vm1048
        %v1050 = vsel %vm1049, %v1041, %v1046
        %v1051 = vmul.f32 %v1034, %v1050
        %v1053 = vperm.slane %v1028, 0
        %v1055 = vmul.f32 %v1051, %v1053
        %v1057 = vperm.slane %v1029, 0
        %v1059 = vadd.f32 %v1055, %v1057
        %s1060 = scalar_lea.vmem %s4, 32
        %v1061 = vld [vmem:[%s1060] sm:$0xff]
        %v1062 = vld [vmem:[%s1060 + $0x8] sm:$0xff]
        %v1063 = vld [vmem:[%s1060 + $0x10] sm:$0xff]
        %v1064 = vld [vmem:[%s1060 + $0x18] sm:$0xff]
        %s1065 = scalar_lea.vmem %s5, 1
        %v1066 = vld [vmem:[%s1065] sm:$0x1]
        %v1068 = vperm.slane %v1066, 0
        %v1071 = vsel %vm672, %v1059, 0
        %1073 = vmatpush.msra.mxu0 0.0
        %1074 = vmatpush.msra.mxu0 0.0
        %1075 = vmatpush.msra.mxu0 0.0
        %1076 = vmatpush.msra.mxu0 0.0
        %1077 = vmatpush.msra.mxu0 0.0
        %1078 = vmatpush.msra.mxu0 0.0
        %1079 = vmatpush.msra.mxu0 0.0
        %1080 = vmatpush.msra.mxu0 0.0
        %1081 = vmatpush.msra.mxu0 0.0
        %1082 = vmatpush.msra.mxu0 0.0
        %1083 = vmatpush.msra.mxu0 0.0
        %1084 = vmatpush.msra.mxu0 0.0
        %1085 = vmatpush.msra.mxu0 %v1064
        %1086 = vmatpush.msra.mxu0 %v1063
        %1087 = vmatpush.msra.mxu0 %v1062
        %1088 = vmatpush.msra.mxu0 %v1061
        %1089 = vmatmul.f32.gmra.mxu0 %v1071
        %v1090 = vpop.f32.mrf.mxu0
        %v1091 = vadd.f32 %v1068, %v1090
        %1092 = vdwg.mxu0
        %1094 = vrot.lane.b32.xlu0 %v1091, 96
        %v1095 = vpop.permute.xlu0 %1094
        %v1096 = vsel %vm747, %v1091, 0
        %v1098 = vsel %vm747, %v1095, 0
        %1100 = vmatpush.xpose.msra.mxu0 0.0
        %1101 = vmatpush.xpose.msra.mxu0 0.0
        %1102 = vmatpush.xpose.msra.mxu0 0.0
        %1103 = vmatpush.xpose.msra.mxu0 0.0
        %1104 = vmatpush.xpose.msra.mxu0 0.0
        %1105 = vmatpush.xpose.msra.mxu0 0.0
        %1106 = vmatpush.xpose.msra.mxu0 0.0
        %1107 = vmatpush.xpose.msra.mxu0 0.0
        %1108 = vmatpush.xpose.msra.mxu0 0.0
        %1109 = vmatpush.xpose.msra.mxu0 0.0
        %1110 = vmatpush.xpose.msra.mxu0 0.0
        %1111 = vmatpush.xpose.msra.mxu0 0.0
        %1112 = vmatpush.xpose.msra.mxu0 0.0
        %1113 = vmatpush.xpose.msra.mxu0 0.0
        %1114 = vmatpush.xpose.msra.mxu0 0.0
        %1115 = vmatpush.xpose.msra.mxu0 %v1098
        %1116 = vmatmul.f32.gmra.mxu0 %v1096
        %v1117 = vpop.f32.mrf.mxu0
        %v1118 = vadd.f32 0.0, %v1117
        %1119 = vdwg.mxu0
        %v1120 = vmul.f32 %v1118, 0.25
        %v1121 = vadd.f32 %v1120, %v774
        %v1122 = vsel %vm777, %v1121, -inf
        %1123 = vmax.xlane.f32.xlu0 %v1122
        %v1124 = vpop.xlane.xlu0 %1123
        %v1125 = vsub.f32 %v1121, %v1124
        %v1126 = vmul.f32 %v1125, 1.442695
        %v1127 = vpow.pop %v1126
        %v1128 = vsel %vm777, %v1127, 0.0
        %1129 = vadd.xlane.f32.xlu0 %v1128
        %v1130 = vpop.xlane.xlu0 %1129
        %v1131 = vrcp.pop %v1130
        %v1132 = vmul.f32 %v1127, %v1131
        %1133 = vrot.lane.b32.xlu0 %v1091, 64
        %v1134 = vpop.permute.xlu0 %1133
        %v1137 = vsel %vm777, %v1132, 0
        %1139 = vmatpush.msra.mxu0 0.0
        %1140 = vmatpush.msra.mxu0 0.0
        %1141 = vmatpush.msra.mxu0 0.0
        %1142 = vmatpush.msra.mxu0 0.0
        %1143 = vmatpush.msra.mxu0 0.0
        %1144 = vmatpush.msra.mxu0 0.0
        %1145 = vmatpush.msra.mxu0 0.0
        %1146 = vmatpush.msra.mxu0 0.0
        %1147 = vmatpush.msra.mxu0 0.0
        %1148 = vmatpush.msra.mxu0 0.0
        %1149 = vmatpush.msra.mxu0 0.0
        %1150 = vmatpush.msra.mxu0 0.0
        %1151 = vmatpush.msra.mxu0 0.0
        %1152 = vmatpush.msra.mxu0 0.0
        %1153 = vmatpush.msra.mxu0 0.0
        %1154 = vmatpush.msra.mxu0 %v1134
        %1155 = vmatmul.f32.gmra.mxu0 %v1137
        %v1156 = vpop.f32.mrf.mxu0
        %v1157 = vadd.f32 0.0, %v1156
        %1158 = vdwg.mxu0
        %1159 = vrot.lane.b32.xlu0 %v1091, 112
        %v1160 = vpop.permute.xlu0 %1159
        %1161 = vrot.lane.b32.xlu0 %v1091, 80
        %v1162 = vpop.permute.xlu0 %1161
        %v1163 = vsel %vm747, %v1160, 0
        %v1165 = vsel %vm747, %v1162, 0
        %1167 = vmatpush.xpose.msra.mxu0 0.0
        %1168 = vmatpush.xpose.msra.mxu0 0.0
        %1169 = vmatpush.xpose.msra.mxu0 0.0
        %1170 = vmatpush.xpose.msra.mxu0 0.0
        %1171 = vmatpush.xpose.msra.mxu0 0.0
        %1172 = vmatpush.xpose.msra.mxu0 0.0
        %1173 = vmatpush.xpose.msra.mxu0 0.0
        %1174 = vmatpush.xpose.msra.mxu0 0.0
        %1175 = vmatpush.xpose.msra.mxu0 0.0
        %1176 = vmatpush.xpose.msra.mxu0 0.0
        %1177 = vmatpush.xpose.msra.mxu0 0.0
        %1178 = vmatpush.xpose.msra.mxu0 0.0
        %1179 = vmatpush.xpose.msra.mxu0 0.0
        %1180 = vmatpush.xpose.msra.mxu0 0.0
        %1181 = vmatpush.xpose.msra.mxu0 0.0
        %1182 = vmatpush.xpose.msra.mxu0 %v1165
        %1183 = vmatmul.f32.gmra.mxu0 %v1163
        %v1184 = vpop.f32.mrf.mxu0
        %v1185 = vadd.f32 0.0, %v1184
        %1186 = vdwg.mxu0
        %v1187 = vmul.f32 %v1185, 0.25
        %v1188 = vadd.f32 %v1187, %v774
        %v1189 = vsel %vm777, %v1188, -inf
        %1190 = vmax.xlane.f32.xlu0 %v1189
        %v1191 = vpop.xlane.xlu0 %1190
        %v1192 = vsub.f32 %v1188, %v1191
        %v1193 = vmul.f32 %v1192, 1.442695
        %v1194 = vpow.pop %v1193
        %v1195 = vsel %vm777, %v1194, 0.0
        %1196 = vadd.xlane.f32.xlu0 %v1195
        %v1197 = vpop.xlane.xlu0 %1196
        %v1198 = vrcp.pop %v1197
        %v1199 = vmul.f32 %v1194, %v1198
        %1200 = vrot.lane.b32.xlu0 %v1091, 48
        %v1201 = vpop.permute.xlu0 %1200
        %v1204 = vsel %vm777, %v1199, 0
        %1206 = vmatpush.msra.mxu0 0.0
        %1207 = vmatpush.msra.mxu0 0.0
        %1208 = vmatpush.msra.mxu0 0.0
        %1209 = vmatpush.msra.mxu0 0.0
        %1210 = vmatpush.msra.mxu0 0.0
        %1211 = vmatpush.msra.mxu0 0.0
        %1212 = vmatpush.msra.mxu0 0.0
        %1213 = vmatpush.msra.mxu0 0.0
        %1214 = vmatpush.msra.mxu0 0.0
        %1215 = vmatpush.msra.mxu0 0.0
        %1216 = vmatpush.msra.mxu0 0.0
        %1217 = vmatpush.msra.mxu0 0.0
        %1218 = vmatpush.msra.mxu0 0.0
        %1219 = vmatpush.msra.mxu0 0.0
        %1220 = vmatpush.msra.mxu0 0.0
        %1221 = vmatpush.msra.mxu0 %v1201
        %1222 = vmatmul.f32.gmra.mxu0 %v1204
        %v1223 = vpop.f32.mrf.mxu0
        %v1224 = vadd.f32 0.0, %v1223
        %1225 = vdwg.mxu0
        %1227 = vrot.lane.b32.xlu0 %v1224, 16
        %v1228 = vpop.permute.xlu0 %1227
        %v1230 = vsel %vm747, %v1157, %v1228
        %s1231 = scalar_lea.vmem %s6, 32
        %v1232 = vld [vmem:[%s1231] sm:$0xff]
        %v1233 = vld [vmem:[%s1231 + $0x8] sm:$0xff]
        %v1234 = vld [vmem:[%s1231 + $0x10] sm:$0xff]
        %v1235 = vld [vmem:[%s1231 + $0x18] sm:$0xff]
        %s1236 = scalar_lea.vmem %s7, 1
        %v1237 = vld [vmem:[%s1236] sm:$0x1]
        %v1239 = vperm.slane %v1237, 0
        %v1242 = vsel %vm672, %v1230, 0
        %1244 = vmatpush.msra.mxu0 0.0
        %1245 = vmatpush.msra.mxu0 0.0
        %1246 = vmatpush.msra.mxu0 0.0
        %1247 = vmatpush.msra.mxu0 0.0
        %1248 = vmatpush.msra.mxu0 0.0
        %1249 = vmatpush.msra.mxu0 0.0
        %1250 = vmatpush.msra.mxu0 0.0
        %1251 = vmatpush.msra.mxu0 0.0
        %1252 = vmatpush.msra.mxu0 0.0
        %1253 = vmatpush.msra.mxu0 0.0
        %1254 = vmatpush.msra.mxu0 0.0
        %1255 = vmatpush.msra.mxu0 0.0
        %1256 = vmatpush.msra.mxu0 %v1235
        %1257 = vmatpush.msra.mxu0 %v1234
        %1258 = vmatpush.msra.mxu0 %v1233
        %1259 = vmatpush.msra.mxu0 %v1232
        %1260 = vmatmul.f32.gmra.mxu0 %v1242
        %v1261 = vpop.f32.mrf.mxu0
        %v1262 = vadd.f32 %v1239, %v1261
        %1263 = vdwg.mxu0
        %v1264 = vadd.f32 %v1262, %v1059
        %s1265 = scalar_lea.vmem %s8, 1
        %v1266 = vld [vmem:[%s1265] sm:$0x1]
        %s1267 = scalar_lea.vmem [#allocation8], 1
        %v1268 = vld [vmem:[%s1267] sm:$0x1]
        %v1269 = vsel %vm672, %v1264, 0.0
        %1270 = vadd.xlane.f32.xlu0 %v1269
        %v1271 = vpop.xlane.xlu0 %1270
        %v1272 = vmul.f32 %v1271, %v682
        %v1273 = vsub.f32 %v1264, %v1272
        %v1274 = vmul.f32 %v1273, %v1273
        %v1275 = vsel %vm672, %v1274, 0.0
        %1276 = vadd.xlane.f32.xlu0 %v1275
        %v1277 = vpop.xlane.xlu0 %1276
        %v1278 = vmul.f32 %v1277, %v682
        %v1279 = vadd.f32 %v1278, 1e-12
        %v1280 = vrsqrt.pop %v1279
        %v1281 = vmul.f32 %v1280, %v1279
        %v1282 = vmul.f32 %v1281, %v1280
        %v1283 = vmul.f32 0.5, %v1282
        %v1284 = vsub.f32 1.5, %v1283
        %v1285 = vmul.f32 %v1280, %v1284
        %vm1286 = vweird.f32 %v1279
        %vm1287 = vweird.f32 %v1280
        %vm1288 = vmor %vm1286, %vm1287
        %v1289 = vsel %vm1288, %v1280, %v1285
        %v1290 = vmul.f32 %v1273, %v1289
        %v1292 = vperm.slane %v1266, 0
        %v1294 = vmul.f32 %v1290, %v1292
        %v1296 = vperm.slane %v1268, 0
        %v1298 = vadd.f32 %v1294, %v1296
        %s1299 = scalar_lea.vmem %s10, 32
        %v1300 = vld [vmem:[%s1299] sm:$0xff]
        %v1301 = vld [vmem:[%s1299 + $0x8] sm:$0xff]
        %v1302 = vld [vmem:[%s1299 + $0x10] sm:$0xff]
        %v1303 = vld [vmem:[%s1299 + $0x18] sm:$0xff]
        %s1304 = scalar_lea.vmem %s11, 1
        %v1305 = vld [vmem:[%s1304] sm:$0x1]
        %v1307 = vperm.slane %v1305, 0
        %v1310 = vsel %vm672, %v1298, 0
        %1312 = vmatpush.msra.mxu0 0.0
        %1313 = vmatpush.msra.mxu0 0.0
        %1314 = vmatpush.msra.mxu0 0.0
        %1315 = vmatpush.msra.mxu0 0.0
        %1316 = vmatpush.msra.mxu0 0.0
        %1317 = vmatpush.msra.mxu0 0.0
        %1318 = vmatpush.msra.mxu0 0.0
        %1319 = vmatpush.msra.mxu0 0.0
        %1320 = vmatpush.msra.mxu0 0.0
        %1321 = vmatpush.msra.mxu0 0.0
        %1322 = vmatpush.msra.mxu0 0.0
        %1323 = vmatpush.msra.mxu0 0.0
        %1324 = vmatpush.msra.mxu0 %v1303
        %1325 = vmatpush.msra.mxu0 %v1302
        %1326 = vmatpush.msra.mxu0 %v1301
        %1327 = vmatpush.msra.mxu0 %v1300
        %1328 = vmatmul.f32.gmra.mxu0 %v1310
        %v1329 = vpop.f32.mrf.mxu0
        %v1330 = vadd.f32 %v1307, %v1329
        %1331 = vdwg.mxu0
        %v1332 = vmul.f32 %v1330, 0.5
        %v1333 = vmul.f32 %v1330, 0.044715
        %v1334 = vmul.f32 %v1333, %v1330
        %v1335 = vmul.f32 %v1334, %v1330
        %v1336 = vadd.f32 %v1330, %v1335
        %v1337 = vmul.f32 %v1336, 0.7978846
        %v1338 = vtanh.pop %v1337
        %v1339 = vadd.f32 %v1338, 1.0
        %v1340 = vmul.f32 %v1332, %v1339
        %s1341 = scalar_lea.vmem %s12, 64
        %v1342 = vld [vmem:[%s1341] sm:$0xff]
        %v1343 = vld [vmem:[%s1341 + $0x8] sm:$0xff]
        %v1344 = vld [vmem:[%s1341 + $0x10] sm:$0xff]
        %v1345 = vld [vmem:[%s1341 + $0x18] sm:$0xff]
        %v1346 = vld [vmem:[%s1341 + $0x20] sm:$0xff]
        %v1347 = vld [vmem:[%s1341 + $0x28] sm:$0xff]
        %v1348 = vld [vmem:[%s1341 + $0x30] sm:$0xff]
        %v1349 = vld [vmem:[%s1341 + $0x38] sm:$0xff]
        %s1350 = scalar_lea.vmem %s13, 1
        %v1351 = vld [vmem:[%s1350] sm:$0x1]
        %v1353 = vperm.slane %v1351, 0
        %v1356 = vsel %vm1003, %v1340, 0
        %1358 = vmatpush.msra.mxu0 0.0
        %1359 = vmatpush.msra.mxu0 0.0
        %1360 = vmatpush.msra.mxu0 0.0
        %1361 = vmatpush.msra.mxu0 0.0
        %1362 = vmatpush.msra.mxu0 0.0
        %1363 = vmatpush.msra.mxu0 0.0
        %1364 = vmatpush.msra.mxu0 0.0
        %1365 = vmatpush.msra.mxu0 0.0
        %1366 = vmatpush.msra.mxu0 %v1349
        %1367 = vmatpush.msra.mxu0 %v1348
        %1368 = vmatpush.msra.mxu0 %v1347
        %1369 = vmatpush.msra.mxu0 %v1346
        %1370 = vmatpush.msra.mxu0 %v1345
        %1371 = vmatpush.msra.mxu0 %v1344
        %1372 = vmatpush.msra.mxu0 %v1343
        %1373 = vmatpush.msra.mxu0 %v1342
        %1374 = vmatmul.f32.gmra.mxu0 %v1356
        %v1375 = vpop.f32.mrf.mxu0
        %v1376 = vadd.f32 %v1353, %v1375
        %1377 = vdwg.mxu0
        %v1378 = vadd.f32 %v1376, %v1298
        %s1379 = scalar_lea.vmem %s14, 1
        %v1380 = vld [vmem:[%s1379] sm:$0x1]
        %s1381 = scalar_lea.vmem [#allocation10], 1
        %v1382 = vld [vmem:[%s1381] sm:$0x1]
        %v1383 = vsel %vm672, %v1378, 0.0
        %1384 = vadd.xlane.f32.xlu0 %v1383
        %v1385 = vpop.xlane.xlu0 %1384
        %v1386 = vmul.f32 %v1385, %v682
        %v1387 = vsub.f32 %v1378, %v1386
        %v1388 = vmul.f32 %v1387, %v1387
        %v1389 = vsel %vm672, %v1388, 0.0
        %1390 = vadd.xlane.f32.xlu0 %v1389
        %v1391 = vpop.xlane.xlu0 %1390
        %v1392 = vmul.f32 %v1391, %v682
        %v1393 = vadd.f32 %v1392, 1e-12
        %v1394 = vrsqrt.pop %v1393
        %v1395 = vmul.f32 %v1394, %v1393
        %v1396 = vmul.f32 %v1395, %v1394
        %v1397 = vmul.f32 0.5, %v1396
        %v1398 = vsub.f32 1.5, %v1397
        %v1399 = vmul.f32 %v1394, %v1398
        %vm1400 = vweird.f32 %v1393
        %vm1401 = vweird.f32 %v1394
        %vm1402 = vmor %vm1400, %vm1401
        %v1403 = vsel %vm1402, %v1394, %v1399
        %v1404 = vmul.f32 %v1387, %v1403
        %v1406 = vperm.slane %v1380, 0
        %v1408 = vmul.f32 %v1404, %v1406
        %v1410 = vperm.slane %v1382, 0
        %v1412 = vadd.f32 %v1408, %v1410
        %v1413 = vld [vmem:[%s16] sm:$0x1]
        %v1414 = vmul.f32 %v1412, %v1413
        %vm1415 = vcmask 253952
        %v1416 = vsel %vm1415, %v1414, 0.0
        %1417 = vadd.xlane.f32.xlu0 %v1416
        %v1418 = vpop.xlane.xlu0 %1417
        %v1419 = vld [vmem:[#allocation2] sm:$0x1]
        %v1420 = vadd.f32 %v1418, %v1419
        %v1421 = vsub.f32 0.0, %v1420
        %v1422 = vmul.f32 %v1421, 1.442695
        %v1423 = vpow.pop %v1422
        %v1424 = vadd.f32 %v1423, 1.0
        %v1425 = vrcp.pop %v1424
        %v1426 = vmul.f32 %v1424, %v1425
        %v1427 = vsub.f32 1.0, %v1426
        %v1428 = vmul.f32 %v1425, %v1427
        %v1429 = vadd.f32 %v1425, %v1428
        %vm1430 = vweird.f32 %v1424
        %vm1431 = vweird.f32 %v1425
        %vm1432 = vmor %vm1430, %vm1431
        %v1433 = vsel %vm1432, %v1425, %v1429
        %v1434 = vand.u32 2147483647, %v1424
        %vm1435 = vcmp.eq.f32.partialorder %v1434, 8.507059e+37
        %v1436 = vand.u32 %v1424, 2147483648
        %v1437 = vor.u32 1.1754944e-38, %v1436
        %v1438 = vsel %vm1435, %v1437, %v1433
        %v1439 = vmul.f32 1.0, %v1438
        %vm1440 = vcmask 0
        %1441 = vst.msk [vmem:[%s668] sm:$0x1] %vm1440, %v1439
        %p1442 = scmp.lt.s32.totalorder %s36, 1
        %s1443 = scalar_select %p1442, %s36, 1
        %s1444 = scalar_lea.vmem %s18, %s1443
        // Predicated region
        $region113: #{tpu_custom_call.1} parent=91 // pred_check
          %p1445 = pneg %p442
        $region114: #{tpu_custom_call.1} parent=91 // pred_check_branch
          %1447 = sbr.rel (%p1445) target = $region116
        $region115: #{tpu_custom_call.1} parent=91 // pred_region
          _
        $region116: #{tpu_custom_call.1} parent=91 // pred_fallthru
          _
      $region92: #{tpu_custom_call.1} parent=5 // pred_fallthru
        _
      %p1448 = scmp.le.s32.totalorder 2, %s31
      // Predicated region
      $region117: #{tpu_custom_call.1} parent=5 // pred_check
        %p1449 = pneg %p1448
      $region118: #{tpu_custom_call.1} parent=5 // pred_check_branch
        %1451 = sbr.rel (%p1449) target = $region120
      $region119: #{tpu_custom_call.1} parent=5 // pred_region
        %s1452 = ssub.s32 %s31, 2
        // Predicated region
        $region121: #{tpu_custom_call.1} parent=119 // pred_check
          %p1453 = pneg %p448
        $region122: #{tpu_custom_call.1} parent=119 // pred_check_branch
          %1455 = sbr.rel (%p1453) target = $region124
        $region123: #{tpu_custom_call.1} parent=119 // pred_region
          %p1456 = scmp.lt.s32.totalorder %s37, 1
          %s1457 = scalar_select %p1456, %s37, 1
          %s1458 = scalar_lea.vmem %s18, %s1457
        $region124: #{tpu_custom_call.1} parent=119 // pred_fallthru
          _
      $region120: #{tpu_custom_call.1} parent=5 // pred_fallthru
        _
    $region6: #{tpu_custom_call.1} parent=1 // loop_footer
      %s35 = sadd.s32 1, %s31
    $region7: #{tpu_custom_call.1} parent=1 // loop_footer_branch
      %30 = sbr.rel target = $region3
    $region8: #{tpu_custom_call.1} parent=1 // loop_exit
      _
    %1459 = vsyncpa [#allocation4], 1
    %s1460 = scalar_lea.sflag [#allocation4], 1
    %1461 = vsyncpa %s1460, 1
    %1462 = vsyncpa [#allocation6], 1
    %1463 = vsyncpa [#allocation9], 1

</llo_original>
